<compile_context>
chip_gen: v7x
topology: tpu7x:2x2x1
jax: 0.10.0
libtpu: 0.0.40
codegen_flags: <defaults>
</compile_context>

<pallas_src>
import math
import functools

import jax
import jax.numpy as jnp
from jax.experimental import pallas as pl
from jax.experimental.pallas import tpu as pltpu

NEG_INF = -1e9
_VOCAB_TILE = 256          # lane-dense vocab tile (fills 256-wide MXU on v6e/v7x)


def _default_vmem_limit():
    # Size the scoped VMEM limit to the actual generation: ~48 MiB on v7x
    # (64 MiB physical per TC), ~96 MiB on v5e/v6e (128 MiB physical).
    try:
        cap = int(pltpu.get_tpu_info().vmem_capacity_bytes)
        return min((cap * 3) // 4, 100 * 1024 * 1024)
    except Exception:
        return 32 * 1024 * 1024


_VMEM_LIMIT = _default_vmem_limit()


def _layernorm(x, g, b, eps=1e-5):
    mu = jnp.mean(x, axis=-1, keepdims=True)
    var = jnp.mean((x - mu) ** 2, axis=-1, keepdims=True)
    return (x - mu) * jax.lax.rsqrt(var + eps) * g + b


def _pick_batch_block(batch):
    """Largest divisor of `batch` that still leaves >=2 batch blocks on the
    'parallel' grid axis (both v7x TensorCores get work) while amortizing the
    per-layer weight DMA over Bb batch elements."""
    if batch <= 2:
        return 1
    best = 1
    for bb in range(1, batch // 2 + 1):
        if batch % bb == 0:
            best = bb
    return best


# ----------------------- fused encoder-stack kernel --------------------------

def lm_stack_kernel(n_head, pad_idx,
                    src_ref, x_ref,
                    wqkv_ref, bqkv_ref, wo_ref, bo_ref,
                    ln1g_ref, ln1b_ref,
                    w1_ref, b1_ref, w2_ref, b2_ref,
                    ln2g_ref, ln2b_ref,
                    out_ref, xres_ref, bias_ref):
    # grid = (batch_block, layer); layer is the inner, sequential ("arbitrary") axis.
    l = pl.program_id(1)
    Bb, S, D = x_ref.shape
    H = n_head
    dk = D // H
    R = Bb * S

    @pl.when(l == 0)
    def _():
        # Activation residency (1 HBM read of x per batch block for the whole stack)
        # + causal|pad additive bias built once and reused by every layer.
        row = jax.lax.broadcasted_iota(jnp.int32, (S, S), 0)
        col = jax.lax.broadcasted_iota(jnp.int32, (S, S), 1)
        causal = col <= row
        for b in range(Bb):
            xres_ref[b * S:(b + 1) * S, :] = x_ref[b].astype(jnp.float32)
            keep = causal & jnp.broadcast_to(src_ref[b] != pad_idx, (S, S))
            bias_ref[b] = jnp.where(keep, 0.0, NEG_INF).astype(jnp.float32)

    x = xres_ref[...]                                   # (R, D) f32 residual stream
    x_bf = x.astype(jnp.bfloat16)

    # ---- attention: fused QKV projection, one (R,D)@(D,3D) MXU matmul ----
    qkv = jnp.dot(x_bf, wqkv_ref[0],
                  preferred_element_type=jnp.float32) + bqkv_ref[0]      # (R, 3D)
    scale = 1.0 / math.sqrt(dk)
    q = qkv[:, :D] * scale                              # fold 1/sqrt(dk) into q
    k = qkv[:, D:2 * D]
    v = qkv[:, 2 * D:]

    def split_heads(m):                                 # (R, H*dk) -> (H, R, dk)
        return jnp.stack([m[:, h * dk:(h + 1) * dk] for h in range(H)],
                         axis=0).astype(jnp.bfloat16)

    qh, kh, vh = split_heads(q), split_heads(k), split_heads(v)

    ctx_rows = []
    for b in range(Bb):                                 # Bb is small & static
        r0 = b * S
        qb = qh[:, r0:r0 + S, :]                        # (H, S, dk)
        kb = kh[:, r0:r0 + S, :]
        vb = vh[:, r0:r0 + S, :]
        s = jnp.einsum('hqd,hkd->hqk', qb, kb,
                       preferred_element_type=jnp.float32) + bias_ref[b][None]
        s = s - jnp.max(s, axis=-1, keepdims=True)
        e = jnp.exp(s)
        p = e * pl.reciprocal(jnp.sum(e, axis=-1, keepdims=True), approx=True)
        ctx = jnp.einsum('hqk,hkd->hqd', p.astype(jnp.bfloat16), vb,
                         preferred_element_type=jnp.float32)             # (H, S, dk)
        ctx_rows.append(jnp.concatenate([ctx[h] for h in range(H)], axis=1))
    ctx_flat = ctx_rows[0] if Bb == 1 else jnp.concatenate(ctx_rows, axis=0)

    # ---- single (R,D)@(D,D) output projection (== concat(heads) @ Wo) ----
    attn = jnp.dot(ctx_flat.astype(jnp.bfloat16), wo_ref[0],
                   preferred_element_type=jnp.float32) + bo_ref[0]

    x1 = _layernorm(x + attn, ln1g_ref[0], ln1b_ref[0])

    ff = jnp.dot(x1.astype(jnp.bfloat16), w1_ref[0],
                 preferred_element_type=jnp.float32) + b1_ref[0]
    ff = jnp.maximum(ff, 0.0)                           # ReLU
    ff = jnp.dot(ff.astype(jnp.bfloat16), w2_ref[0],
                 preferred_element_type=jnp.float32) + b2_ref[0]
    x2 = _layernorm(x1 + ff, ln2g_ref[0], ln2b_ref[0])

    xres_ref[...] = x2                                  # carry to next layer

    @pl.when(l == pl.num_programs(1) - 1)
    def _():
        for b in range(Bb):
            out_ref[b] = x2[b * S:(b + 1) * S, :].astype(out_ref.dtype)


_LAYER_KEYS = ("wqkv", "bqkv", "wo", "bo", "ln1g", "ln1b",
               "w1", "b1", "w2", "b2", "ln2g", "ln2b")


def transformer_stack(src, x, layers, n_head, pad_idx=0, batch_block=None):
    B, S, D = x.shape
    L = layers["wqkv"].shape[0]
    Bb = batch_block if batch_block is not None else _pick_batch_block(B)
    assert B % Bb == 0
    src3 = src.reshape(B, 1, S).astype(jnp.int32)

    def layer_spec(arr):
        zeros = (0,) * (arr.ndim - 1)

        def imap(i, l, z=zeros):
            return (l,) + z
        return pl.BlockSpec((1,) + arr.shape[1:], imap)

    in_specs = (
        [pl.BlockSpec((Bb, 1, S), lambda i, l: (i, 0, 0)),   # token ids (mask source)
         pl.BlockSpec((Bb, S, D), lambda i, l: (i, 0, 0))]   # embeddings (bf16)
        + [layer_spec(layers[k]) for k in _LAYER_KEYS]       # stacked per-layer params
    )

    return pl.pallas_call(
        functools.partial(lm_stack_kernel, n_head, pad_idx),
        out_shape=jax.ShapeDtypeStruct((B, S, D), jnp.bfloat16),
        grid=(B // Bb, L),
        in_specs=in_specs,
        out_specs=pl.BlockSpec((Bb, S, D), lambda i, l: (i, 0, 0)),
        scratch_shapes=[pltpu.VMEM((Bb * S, D), jnp.float32),   # resident activations
                        pltpu.VMEM((Bb, S, S), jnp.float32)],   # causal|pad bias
        compiler_params=pltpu.CompilerParams(
            dimension_semantics=("parallel", "arbitrary"),
            vmem_limit_bytes=_VMEM_LIMIT),
    )(src3, x, *[layers[k] for k in _LAYER_KEYS])


# ----------------------------- vocab projection -------------------------------

def fc_kernel(x_ref, w_ref, b_ref, out_ref):
    out_ref[...] = (jnp.dot(x_ref[...], w_ref[...],
                            preferred_element_type=jnp.float32)
                    + b_ref[...]).astype(out_ref.dtype)


def vocab_projection(x, w_pad, b_pad, vocab_size, *, max_tr=256):
    """x: (B,S,D) bf16. w_pad/b_pad are pre-padded at init to a _VOCAB_TILE multiple."""
    B, S, D = x.shape
    Vp = w_pad.shape[1]
    tn = _VOCAB_TILE
    R = B * S
    xf = x.reshape(R, D)

    Rp = ((R + 7) // 8) * 8
    TR = min(max_tr, Rp)
    if Rp % TR:
        Rp = ((Rp + TR - 1) // TR) * TR
    if Rp != R:
        # TODO(synk): replace the row-tail activation pad with an in-kernel masked store.
        xf = jnp.pad(xf, ((0, Rp - R), (0, 0)))

    out = pl.pallas_call(
        fc_kernel,
        out_shape=jax.ShapeDtypeStruct((Rp, Vp), jnp.float32),
        # vocab axis OUTER, rows INNER: each (D,tn) weight tile is DMA'd once and
        # reused across every row tile (only the small (TR,D) activation restreams).
        grid=(Vp // tn, Rp // TR),
        in_specs=[
            pl.BlockSpec((TR, D), lambda v, r: (r, 0)),
            pl.BlockSpec((D, tn), lambda v, r: (0, v)),
            pl.BlockSpec((1, tn), lambda v, r: (0, v)),
        ],
        out_specs=pl.BlockSpec((TR, tn), lambda v, r: (r, v)),
        compiler_params=pltpu.CompilerParams(
            dimension_semantics=("parallel", "parallel"),
            vmem_limit_bytes=_VMEM_LIMIT),
    )(xf, w_pad, b_pad)
    return out[:R, :vocab_size].reshape(B, S, vocab_size)


# ------------------------------ model glue ------------------------------------

def init_params(key, vocab_size, max_length, d_model, d_ff, n_head, n_enc_layer):
    assert d_model % n_head == 0
    ks = jax.random.split(key, 9)
    std = 0.02

    tok_emb = jax.random.normal(ks[0], (vocab_size, d_model), jnp.float32) * std
    pos_emb = jax.random.normal(ks[1], (max_length, d_model), jnp.float32) * std

    def dense(k, shape):   # bf16 weights for the MXU; f32 accumulation in-kernel
        return (jax.random.normal(k, shape, jnp.float32) * std).astype(jnp.bfloat16)

    # Fused [Wq | Wk | Wv] so the kernel does one (R,D)@(D,3D) projection.
    wqkv = jnp.concatenate([dense(ks[2], (d_model, d_model)),
                            dense(ks[3], (d_model, d_model)),
                            dense(ks[4], (d_model, d_model))], axis=1)

    layer = {
        "wqkv": wqkv,
        "bqkv": jnp.zeros((1, 3 * d_model), jnp.float32),
        "wo": dense(ks[5], (d_model, d_model)),
        "bo": jnp.zeros((1, d_model), jnp.float32),
        "ln1g": jnp.ones((1, d_model), jnp.float32),
        "ln1b": jnp.zeros((1, d_model), jnp.float32),
        "w1": dense(ks[6], (d_model, d_ff)),
        "b1": jnp.zeros((1, d_ff), jnp.float32),
        "w2": dense(ks[7], (d_ff, d_model)),
        "b2": jnp.zeros((1, d_model), jnp.float32),
        "ln2g": jnp.ones((1, d_model), jnp.float32),
        "ln2b": jnp.zeros((1, d_model), jnp.float32),
    }
    # nn.ModuleList([deepcopy(enc) ...]) -> identical initial values per layer.
    layers = {k: jnp.stack([v] * n_enc_layer, axis=0) for k, v in layer.items()}

    # LM head padded to a lane-dense multiple of _VOCAB_TILE ONCE here (not per call).
    v_pad = ((vocab_size + _VOCAB_TILE - 1) // _VOCAB_TILE) * _VOCAB_TILE
    fc_w = jnp.pad(dense(ks[8], (d_model, vocab_size)),
                   ((0, 0), (0, v_pad - vocab_size)))
    fc_b = jnp.zeros((1, v_pad), jnp.float32)
    return {"tok_emb": tok_emb, "pos_emb": pos_emb, "layers": layers,
            "fc_w": fc_w, "fc_b": fc_b}


def lm_forward(src, params, n_head, vocab_size, pad_idx=0):
    B, S = src.shape
    d_model = params["tok_emb"].shape[1]

    # InputEmbedding: scaled token embedding + positional embedding (gather = glue).
    x = params["tok_emb"][src] * math.sqrt(d_model)           # (B, S, D) f32
    x = x + params["pos_emb"][:S][None, :, :]
    x = x.astype(jnp.bfloat16)        # bf16 at the kernel boundary (half HBM traffic)

    # Fused encoder stack (mask built inside the kernel from `src`).
    x = transformer_stack(src, x, params["layers"], n_head, pad_idx)

    return vocab_projection(x, params["fc_w"], params["fc_b"], vocab_size)


# --------------------------------- main ----------------------------------------

if __name__ == "__main__":
    vocab_size, max_length = 50, 16
    d_model, d_ff, n_head = 32, 64, 4
    dropout_p, n_enc_layer = 0.1, 2   # dropout_p unused (inference)
    B, S = 4, 8                       # B=4 -> batch block Bb=2 (2 parallel blocks)

    key = jax.random.PRNGKey(0)
    k_tok, k_params = jax.random.split(key)
    src = jax.random.randint(k_tok, (B, S), 1, vocab_size, dtype=jnp.int32)

    params = init_params(k_params, vocab_size, max_length, d_model, d_ff,
                         n_head, n_enc_layer)

    fwd = jax.jit(functools.partial(lm_forward, n_head=n_head,
                                    vocab_size=vocab_size))
    logits = fwd(src, params)
    jax.block_until_ready(logits)

    assert logits.shape == (B, S, vocab_size), logits.shape
    assert bool(jnp.all(jnp.isfinite(logits))), "non-finite logits"
    print("KERNEL_OK")
</pallas_src>

<mosaic_0001>
module attributes {stable_mosaic.version = 11 : i64} {
  func.func @fc_kernel(%arg0: i32, %arg1: i32, %arg2: memref<32x32xbf16, #tpu.memory_space<vmem>>, %arg3: memref<32x256xbf16, #tpu.memory_space<vmem>>, %arg4: memref<1x256xf32, #tpu.memory_space<vmem>>, %arg5: memref<32x256xf32, #tpu.memory_space<vmem>>) attributes {dimension_semantics = [#tpu.dimension_semantics<parallel>, #tpu.dimension_semantics<parallel>], iteration_bounds = array<i64: 1, 1>, scalar_prefetch = 0 : i64, scratch_operands = 0 : i64, tpu.core_type = #tpu.core_type<tc>, window_params = [{transform_indices = @transform_0, window_bounds = array<i64: 32, 32>}, {transform_indices = @transform_1, window_bounds = array<i64: 32, 256>}, {transform_indices = @transform_2, window_bounds = array<i64: 1, 256>}, {transform_indices = @transform_3, window_bounds = array<i64: 32, 256>}]} {
    %c0 = arith.constant 0 : index
    %c0_0 = arith.constant 0 : index
    %0 = vector.load %arg2[%c0, %c0_0] : memref<32x32xbf16, #tpu.memory_space<vmem>>, vector<32x32xbf16>
    %c0_1 = arith.constant 0 : index
    %c0_2 = arith.constant 0 : index
    %1 = vector.load %arg3[%c0_1, %c0_2] : memref<32x256xbf16, #tpu.memory_space<vmem>>, vector<32x256xbf16>
    %cst = arith.constant dense<0.000000e+00> : vector<32x256xf32>
    %2 = tpu.matmul %0, %1, %cst {dimension_numbers = #tpu.dot_dimension_numbers<[1], [0], [0], [1], [0, 0, 1, 1], [], []>} : vector<32x32xbf16>, vector<32x256xbf16>, vector<32x256xf32> -> vector<32x256xf32>
    %c0_3 = arith.constant 0 : index
    %c0_4 = arith.constant 0 : index
    %3 = vector.load %arg4[%c0_3, %c0_4] : memref<1x256xf32, #tpu.memory_space<vmem>>, vector<1x256xf32>
    %4 = vector.broadcast %3 : vector<1x256xf32> to vector<32x256xf32>
    %5 = arith.addf %2, %4 : vector<32x256xf32>
    %c0_5 = arith.constant 0 : index
    %c0_6 = arith.constant 0 : index
    %6 = vector.load %arg5[%c0_5, %c0_6] : memref<32x256xf32, #tpu.memory_space<vmem>>, vector<32x256xf32>
    tpu.vector_store %arg5[%c0_5, %c0_6], %5 {strides = array<i32>} : memref<32x256xf32, #tpu.memory_space<vmem>>, vector<32x256xf32>,
    return
  }
  func.func @transform_0(%arg0: i32, %arg1: i32) -> (i32, i32) {
    %c0_i32 = arith.constant 0 : i32
    %c0_i32_0 = arith.constant 0 : i32
    return %arg1, %c0_i32 : i32, i32
  }
  func.func @transform_1(%arg0: i32, %arg1: i32) -> (i32, i32) {
    %c0_i32 = arith.constant 0 : i32
    %c0_i32_0 = arith.constant 0 : i32
    return %c0_i32, %arg0 : i32, i32
  }
  func.func @transform_2(%arg0: i32, %arg1: i32) -> (i32, i32) {
    %c0_i32 = arith.constant 0 : i32
    %c0_i32_0 = arith.constant 0 : i32
    return %c0_i32, %arg0 : i32, i32
  }
  func.func @transform_3(%arg0: i32, %arg1: i32) -> (i32, i32) {
    %c0_i32 = arith.constant 0 : i32
    return %arg1, %arg0 : i32, i32
  }
}

module attributes {stable_mosaic.version = 11 : i64} {
  func.func @lm_stack_kernel(%arg0: i32, %arg1: i32, %arg2: memref<2x1x8xi32, #tpu.memory_space<vmem>>, %arg3: memref<2x8x32xbf16, #tpu.memory_space<vmem>>, %arg4: memref<1x32x96xbf16, #tpu.memory_space<vmem>>, %arg5: memref<1x1x96xf32, #tpu.memory_space<vmem>>, %arg6: memref<1x32x32xbf16, #tpu.memory_space<vmem>>, %arg7: memref<1x1x32xf32, #tpu.memory_space<vmem>>, %arg8: memref<1x1x32xf32, #tpu.memory_space<vmem>>, %arg9: memref<1x1x32xf32, #tpu.memory_space<vmem>>, %arg10: memref<1x32x64xbf16, #tpu.memory_space<vmem>>, %arg11: memref<1x1x64xf32, #tpu.memory_space<vmem>>, %arg12: memref<1x64x32xbf16, #tpu.memory_space<vmem>>, %arg13: memref<1x1x32xf32, #tpu.memory_space<vmem>>, %arg14: memref<1x1x32xf32, #tpu.memory_space<vmem>>, %arg15: memref<1x1x32xf32, #tpu.memory_space<vmem>>, %arg16: memref<2x8x32xbf16, #tpu.memory_space<vmem>>, %arg17: memref<16x32xf32, #tpu.memory_space<vmem>>, %arg18: memref<2x8x8xf32, #tpu.memory_space<vmem>>) attributes {dimension_semantics = [#tpu.dimension_semantics<parallel>, #tpu.dimension_semantics<arbitrary>], iteration_bounds = array<i64: 2, 2>, scalar_prefetch = 0 : i64, scratch_operands = 2 : i64, tpu.core_type = #tpu.core_type<tc>, window_params = [{transform_indices = @transform_0, window_bounds = array<i64: 2, 1, 8>}, {transform_indices = @transform_1, window_bounds = array<i64: 2, 8, 32>}, {transform_indices = @transform_2, window_bounds = array<i64: 1, 32, 96>}, {transform_indices = @transform_3, window_bounds = array<i64: 1, 1, 96>}, {transform_indices = @transform_4, window_bounds = array<i64: 1, 32, 32>}, {transform_indices = @transform_5, window_bounds = array<i64: 1, 1, 32>}, {transform_indices = @transform_6, window_bounds = array<i64: 1, 1, 32>}, {transform_indices = @transform_7, window_bounds = array<i64: 1, 1, 32>}, {transform_indices = @transform_8, window_bounds = array<i64: 1, 32, 64>}, {transform_indices = @transform_9, window_bounds = array<i64: 1, 1, 64>}, {transform_indices = @transform_10, window_bounds = array<i64: 1, 64, 32>}, {transform_indices = @transform_11, window_bounds = array<i64: 1, 1, 32>}, {transform_indices = @transform_12, window_bounds = array<i64: 1, 1, 32>}, {transform_indices = @transform_13, window_bounds = array<i64: 1, 1, 32>}, {transform_indices = @transform_14, window_bounds = array<i64: 2, 8, 32>}]} {
    %c0_i32 = arith.constant 0 : i32
    %0 = arith.cmpi eq, %arg1, %c0_i32 : i32
    %1 = arith.extui %0 : i1 to i32
    %c0_i32_0 = arith.constant 0 : i32
    %2 = arith.cmpi ne, %1, %c0_i32_0 : i32
    scf.if %2 {
      %192 = tpu.iota {dimensions = array<i32: 0>} : vector<8x8xi32>
      %193 = tpu.iota {dimensions = array<i32: 1>} : vector<8x8xi32>
      %194 = arith.cmpi sle, %193, %192 : vector<8x8xi32>
      %c0_69 = arith.constant 0 : index
      %c0_70 = arith.constant 0 : index
      %c0_71 = arith.constant 0 : index
      %195 = vector.load %arg3[%c0_69, %c0_70, %c0_71] : memref<2x8x32xbf16, #tpu.memory_space<vmem>>, vector<1x8x32xbf16>
      %196 = vector.shape_cast %195 : vector<1x8x32xbf16> to vector<8x32xbf16>
      %197 = arith.extf %196 : vector<8x32xbf16> to vector<8x32xf32>
      %c0_72 = arith.constant 0 : index
      %c0_73 = arith.constant 0 : index
      %198 = vector.load %arg17[%c0_72, %c0_73] : memref<16x32xf32, #tpu.memory_space<vmem>>, vector<8x32xf32>
      tpu.vector_store %arg17[%c0_72, %c0_73], %197 {strides = array<i32>} : memref<16x32xf32, #tpu.memory_space<vmem>>, vector<8x32xf32>,
      %c0_74 = arith.constant 0 : index
      %c0_75 = arith.constant 0 : index
      %c0_76 = arith.constant 0 : index
      %199 = vector.load %arg2[%c0_74, %c0_75, %c0_76] : memref<2x1x8xi32, #tpu.memory_space<vmem>>, vector<1x1x8xi32>
      %200 = vector.shape_cast %199 : vector<1x1x8xi32> to vector<1x8xi32>
      %c0_i32_77 = arith.constant 0 : i32
      %201 = vector.broadcast %c0_i32_77 : i32 to vector<1x8xi32>
      %202 = arith.cmpi ne, %200, %201 : vector<1x8xi32>
      %203 = vector.shape_cast %202 : vector<1x8xi1> to vector<1x8xi1>
      %204 = vector.broadcast %203 : vector<1x8xi1> to vector<8x8xi1>
      %205 = arith.andi %194, %204 : vector<8x8xi1>
      %cst_78 = arith.constant 0.000000e+00 : f32
      %cst_79 = arith.constant -1.000000e+09 : f32
      %206 = vector.broadcast %cst_78 : f32 to vector<8x8xf32>
      %207 = vector.broadcast %cst_79 : f32 to vector<8x8xf32>
      %208 = arith.select %205, %206, %207 : vector<8x8xi1>, vector<8x8xf32>
      %c0_80 = arith.constant 0 : index
      %c0_81 = arith.constant 0 : index
      %c0_82 = arith.constant 0 : index
      %209 = vector.load %arg18[%c0_80, %c0_81, %c0_82] : memref<2x8x8xf32, #tpu.memory_space<vmem>>, vector<1x8x8xf32>
      %210 = vector.shape_cast %209 : vector<1x8x8xf32> to vector<8x8xf32>
      %211 = vector.shape_cast %208 : vector<8x8xf32> to vector<1x8x8xf32>
      tpu.vector_store %arg18[%c0_80, %c0_81, %c0_82], %211 {strides = array<i32>} : memref<2x8x8xf32, #tpu.memory_space<vmem>>, vector<1x8x8xf32>,
      %c1_83 = arith.constant 1 : index
      %c0_84 = arith.constant 0 : index
      %c0_85 = arith.constant 0 : index
      %212 = vector.load %arg3[%c1_83, %c0_84, %c0_85] : memref<2x8x32xbf16, #tpu.memory_space<vmem>>, vector<1x8x32xbf16>
      %213 = vector.shape_cast %212 : vector<1x8x32xbf16> to vector<8x32xbf16>
      %214 = arith.extf %213 : vector<8x32xbf16> to vector<8x32xf32>
      %c8 = arith.constant 8 : index
      %c0_86 = arith.constant 0 : index
      %215 = vector.load %arg17[%c8, %c0_86] : memref<16x32xf32, #tpu.memory_space<vmem>>, vector<8x32xf32>
      tpu.vector_store %arg17[%c8, %c0_86], %214 {strides = array<i32>} : memref<16x32xf32, #tpu.memory_space<vmem>>, vector<8x32xf32>,
      %c1_87 = arith.constant 1 : index
      %c0_88 = arith.constant 0 : index
      %c0_89 = arith.constant 0 : index
      %216 = vector.load %arg2[%c1_87, %c0_88, %c0_89] : memref<2x1x8xi32, #tpu.memory_space<vmem>>, vector<1x1x8xi32>
      %217 = vector.shape_cast %216 : vector<1x1x8xi32> to vector<1x8xi32>
      %c0_i32_90 = arith.constant 0 : i32
      %218 = vector.broadcast %c0_i32_90 : i32 to vector<1x8xi32>
      %219 = arith.cmpi ne, %217, %218 : vector<1x8xi32>
      %220 = vector.shape_cast %219 : vector<1x8xi1> to vector<1x8xi1>
      %221 = vector.broadcast %220 : vector<1x8xi1> to vector<8x8xi1>
      %222 = arith.andi %194, %221 : vector<8x8xi1>
      %cst_91 = arith.constant 0.000000e+00 : f32
      %cst_92 = arith.constant -1.000000e+09 : f32
      %223 = vector.broadcast %cst_91 : f32 to vector<8x8xf32>
      %224 = vector.broadcast %cst_92 : f32 to vector<8x8xf32>
      %225 = arith.select %222, %223, %224 : vector<8x8xi1>, vector<8x8xf32>
      %c1_93 = arith.constant 1 : index
      %c0_94 = arith.constant 0 : index
      %c0_95 = arith.constant 0 : index
      %226 = vector.load %arg18[%c1_93, %c0_94, %c0_95] : memref<2x8x8xf32, #tpu.memory_space<vmem>>, vector<1x8x8xf32>
      %227 = vector.shape_cast %226 : vector<1x8x8xf32> to vector<8x8xf32>
      %228 = vector.shape_cast %225 : vector<8x8xf32> to vector<1x8x8xf32>
      tpu.vector_store %arg18[%c1_93, %c0_94, %c0_95], %228 {strides = array<i32>} : memref<2x8x8xf32, #tpu.memory_space<vmem>>, vector<1x8x8xf32>,
    } else {
    }
    %c0 = arith.constant 0 : index
    %c0_1 = arith.constant 0 : index
    %3 = vector.load %arg17[%c0, %c0_1] : memref<16x32xf32, #tpu.memory_space<vmem>>, vector<16x32xf32>
    %4 = arith.truncf %3 : vector<16x32xf32> to vector<16x32xbf16>
    %c0_2 = arith.constant 0 : index
    %c0_3 = arith.constant 0 : index
    %c0_4 = arith.constant 0 : index
    %5 = vector.load %arg4[%c0_2, %c0_3, %c0_4] : memref<1x32x96xbf16, #tpu.memory_space<vmem>>, vector<1x32x96xbf16>
    %6 = vector.shape_cast %5 : vector<1x32x96xbf16> to vector<32x96xbf16>
    %cst = arith.constant dense<0.000000e+00> : vector<16x96xf32>
    %7 = tpu.matmul %4, %6, %cst {dimension_numbers = #tpu.dot_dimension_numbers<[1], [0], [0], [1], [0, 0, 1, 1], [], []>} : vector<16x32xbf16>, vector<32x96xbf16>, vector<16x96xf32> -> vector<16x96xf32>
    %c0_5 = arith.constant 0 : index
    %c0_6 = arith.constant 0 : index
    %c0_7 = arith.constant 0 : index
    %8 = vector.load %arg5[%c0_5, %c0_6, %c0_7] : memref<1x1x96xf32, #tpu.memory_space<vmem>>, vector<1x1x96xf32>
    %9 = vector.shape_cast %8 : vector<1x1x96xf32> to vector<1x96xf32>
    %10 = vector.broadcast %9 : vector<1x96xf32> to vector<16x96xf32>
    %11 = arith.addf %7, %10 : vector<16x96xf32>
    %12 = vector.extract_strided_slice %11 {offsets = [0, 0], sizes = [16, 32], strides = [1, 1]} : vector<16x96xf32> to vector<16x32xf32>
    %cst_8 = arith.constant 0.353553385 : f32
    %13 = vector.broadcast %cst_8 : f32 to vector<16x32xf32>
    %14 = arith.mulf %12, %13 : vector<16x32xf32>
    %15 = vector.extract_strided_slice %11 {offsets = [0, 32], sizes = [16, 32], strides = [1, 1]} : vector<16x96xf32> to vector<16x32xf32>
    %16 = vector.extract_strided_slice %11 {offsets = [0, 64], sizes = [16, 32], strides = [1, 1]} : vector<16x96xf32> to vector<16x32xf32>
    %17 = vector.extract_strided_slice %14 {offsets = [0, 0], sizes = [16, 8], strides = [1, 1]} : vector<16x32xf32> to vector<16x8xf32>
    %18 = vector.extract_strided_slice %14 {offsets = [0, 8], sizes = [16, 8], strides = [1, 1]} : vector<16x32xf32> to vector<16x8xf32>
    %19 = vector.extract_strided_slice %14 {offsets = [0, 16], sizes = [16, 8], strides = [1, 1]} : vector<16x32xf32> to vector<16x8xf32>
    %20 = vector.extract_strided_slice %14 {offsets = [0, 24], sizes = [16, 8], strides = [1, 1]} : vector<16x32xf32> to vector<16x8xf32>
    %21 = vector.shape_cast %17 : vector<16x8xf32> to vector<1x16x8xf32>
    %22 = vector.shape_cast %18 : vector<16x8xf32> to vector<1x16x8xf32>
    %23 = vector.shape_cast %19 : vector<16x8xf32> to vector<1x16x8xf32>
    %24 = vector.shape_cast %20 : vector<16x8xf32> to vector<1x16x8xf32>
    %25 = tpu.concatenate %21, %22, %23, %24 in 0 : vector<1x16x8xf32>, vector<1x16x8xf32>, vector<1x16x8xf32>, vector<1x16x8xf32> -> vector<4x16x8xf32>
    %26 = arith.truncf %25 : vector<4x16x8xf32> to vector<4x16x8xbf16>
    %27 = vector.extract_strided_slice %15 {offsets = [0, 0], sizes = [16, 8], strides = [1, 1]} : vector<16x32xf32> to vector<16x8xf32>
    %28 = vector.extract_strided_slice %15 {offsets = [0, 8], sizes = [16, 8], strides = [1, 1]} : vector<16x32xf32> to vector<16x8xf32>
    %29 = vector.extract_strided_slice %15 {offsets = [0, 16], sizes = [16, 8], strides = [1, 1]} : vector<16x32xf32> to vector<16x8xf32>
    %30 = vector.extract_strided_slice %15 {offsets = [0, 24], sizes = [16, 8], strides = [1, 1]} : vector<16x32xf32> to vector<16x8xf32>
    %31 = vector.shape_cast %27 : vector<16x8xf32> to vector<1x16x8xf32>
    %32 = vector.shape_cast %28 : vector<16x8xf32> to vector<1x16x8xf32>
    %33 = vector.shape_cast %29 : vector<16x8xf32> to vector<1x16x8xf32>
    %34 = vector.shape_cast %30 : vector<16x8xf32> to vector<1x16x8xf32>
    %35 = tpu.concatenate %31, %32, %33, %34 in 0 : vector<1x16x8xf32>, vector<1x16x8xf32>, vector<1x16x8xf32>, vector<1x16x8xf32> -> vector<4x16x8xf32>
    %36 = arith.truncf %35 : vector<4x16x8xf32> to vector<4x16x8xbf16>
    %37 = vector.extract_strided_slice %16 {offsets = [0, 0], sizes = [16, 8], strides = [1, 1]} : vector<16x32xf32> to vector<16x8xf32>
    %38 = vector.extract_strided_slice %16 {offsets = [0, 8], sizes = [16, 8], strides = [1, 1]} : vector<16x32xf32> to vector<16x8xf32>
    %39 = vector.extract_strided_slice %16 {offsets = [0, 16], sizes = [16, 8], strides = [1, 1]} : vector<16x32xf32> to vector<16x8xf32>
    %40 = vector.extract_strided_slice %16 {offsets = [0, 24], sizes = [16, 8], strides = [1, 1]} : vector<16x32xf32> to vector<16x8xf32>
    %41 = vector.shape_cast %37 : vector<16x8xf32> to vector<1x16x8xf32>
    %42 = vector.shape_cast %38 : vector<16x8xf32> to vector<1x16x8xf32>
    %43 = vector.shape_cast %39 : vector<16x8xf32> to vector<1x16x8xf32>
    %44 = vector.shape_cast %40 : vector<16x8xf32> to vector<1x16x8xf32>
    %45 = tpu.concatenate %41, %42, %43, %44 in 0 : vector<1x16x8xf32>, vector<1x16x8xf32>, vector<1x16x8xf32>, vector<1x16x8xf32> -> vector<4x16x8xf32>
    %46 = arith.truncf %45 : vector<4x16x8xf32> to vector<4x16x8xbf16>
    %47 = vector.extract_strided_slice %26 {offsets = [0, 0, 0], sizes = [4, 8, 8], strides = [1, 1, 1]} : vector<4x16x8xbf16> to vector<4x8x8xbf16>
    %48 = vector.extract_strided_slice %36 {offsets = [0, 0, 0], sizes = [4, 8, 8], strides = [1, 1, 1]} : vector<4x16x8xbf16> to vector<4x8x8xbf16>
    %49 = vector.extract_strided_slice %46 {offsets = [0, 0, 0], sizes = [4, 8, 8], strides = [1, 1, 1]} : vector<4x16x8xbf16> to vector<4x8x8xbf16>
    "tpu.trace_start"() <{level = 10 : i32, message = "hqd,hkd->hqk"}> : () -> ()
    %cst_9 = arith.constant dense<0.000000e+00> : vector<4x8x8xf32>
    %50 = tpu.matmul %47, %48, %cst_9 {dimension_numbers = #tpu.dot_dimension_numbers<[2], [2], [1], [1], [0, 0, 0, 1, 1, 1], [0], [0]>} : vector<4x8x8xbf16>, vector<4x8x8xbf16>, vector<4x8x8xf32> -> vector<4x8x8xf32>
    "tpu.trace_stop"() : () -> ()
    %c0_10 = arith.constant 0 : index
    %c0_11 = arith.constant 0 : index
    %c0_12 = arith.constant 0 : index
    %51 = vector.load %arg18[%c0_10, %c0_11, %c0_12] : memref<2x8x8xf32, #tpu.memory_space<vmem>>, vector<1x8x8xf32>
    %52 = vector.shape_cast %51 : vector<1x8x8xf32> to vector<8x8xf32>
    %53 = vector.shape_cast %52 : vector<8x8xf32> to vector<1x8x8xf32>
    %54 = vector.broadcast %53 : vector<1x8x8xf32> to vector<4x8x8xf32>
    %55 = arith.addf %50, %54 : vector<4x8x8xf32>
    %cst_13 = arith.constant dense<0xFF800000> : vector<4x8xf32>
    %56 = vector.multi_reduction <maximumf>, %55, %cst_13 [2] : vector<4x8x8xf32> to vector<4x8xf32>
    %57 = vector.shape_cast %56 : vector<4x8xf32> to vector<4x8x1xf32>
    %58 = vector.broadcast %57 : vector<4x8x1xf32> to vector<4x8x8xf32>
    %59 = arith.subf %55, %58 : vector<4x8x8xf32>
    %60 = math.exp %59 : vector<4x8x8xf32>
    %cst_14 = arith.constant dense<0.000000e+00> : vector<4x8xf32>
    %61 = vector.multi_reduction <add>, %60, %cst_14 [2] : vector<4x8x8xf32> to vector<4x8xf32>
    %62 = vector.shape_cast %61 : vector<4x8xf32> to vector<4x8x1xf32>
    %63 = tpu.reciprocal %62 {approx = true} : vector<4x8x1xf32> -> vector<4x8x1xf32>
    %64 = vector.broadcast %63 : vector<4x8x1xf32> to vector<4x8x8xf32>
    %65 = arith.mulf %60, %64 : vector<4x8x8xf32>
    %66 = arith.truncf %65 : vector<4x8x8xf32> to vector<4x8x8xbf16>
    "tpu.trace_start"() <{level = 10 : i32, message = "hqk,hkd->hqd"}> : () -> ()
    %cst_15 = arith.constant dense<0.000000e+00> : vector<4x8x8xf32>
    %67 = tpu.matmul %66, %49, %cst_15 {dimension_numbers = #tpu.dot_dimension_numbers<[2], [1], [1], [2], [0, 0, 0, 1, 1, 2], [0], [0]>} : vector<4x8x8xbf16>, vector<4x8x8xbf16>, vector<4x8x8xf32> -> vector<4x8x8xf32>
    "tpu.trace_stop"() : () -> ()
    %68 = vector.extract_strided_slice %67 {offsets = [0, 0, 0], sizes = [1, 8, 8], strides = [1, 1, 1]} : vector<4x8x8xf32> to vector<1x8x8xf32>
    %69 = vector.shape_cast %68 : vector<1x8x8xf32> to vector<8x8xf32>
    %70 = vector.extract_strided_slice %67 {offsets = [1, 0, 0], sizes = [1, 8, 8], strides = [1, 1, 1]} : vector<4x8x8xf32> to vector<1x8x8xf32>
    %71 = vector.shape_cast %70 : vector<1x8x8xf32> to vector<8x8xf32>
    %72 = vector.extract_strided_slice %67 {offsets = [2, 0, 0], sizes = [1, 8, 8], strides = [1, 1, 1]} : vector<4x8x8xf32> to vector<1x8x8xf32>
    %73 = vector.shape_cast %72 : vector<1x8x8xf32> to vector<8x8xf32>
    %74 = vector.extract_strided_slice %67 {offsets = [3, 0, 0], sizes = [1, 8, 8], strides = [1, 1, 1]} : vector<4x8x8xf32> to vector<1x8x8xf32>
    %75 = vector.shape_cast %74 : vector<1x8x8xf32> to vector<8x8xf32>
    %76 = tpu.concatenate %69, %71, %73, %75 in 1 : vector<8x8xf32>, vector<8x8xf32>, vector<8x8xf32>, vector<8x8xf32> -> vector<8x32xf32>
    %77 = vector.extract_strided_slice %26 {offsets = [0, 8, 0], sizes = [4, 8, 8], strides = [1, 1, 1]} : vector<4x16x8xbf16> to vector<4x8x8xbf16>
    %78 = vector.extract_strided_slice %36 {offsets = [0, 8, 0], sizes = [4, 8, 8], strides = [1, 1, 1]} : vector<4x16x8xbf16> to vector<4x8x8xbf16>
    %79 = vector.extract_strided_slice %46 {offsets = [0, 8, 0], sizes = [4, 8, 8], strides = [1, 1, 1]} : vector<4x16x8xbf16> to vector<4x8x8xbf16>
    "tpu.trace_start"() <{level = 10 : i32, message = "hqd,hkd->hqk"}> : () -> ()
    %cst_16 = arith.constant dense<0.000000e+00> : vector<4x8x8xf32>
    %80 = tpu.matmul %77, %78, %cst_16 {dimension_numbers = #tpu.dot_dimension_numbers<[2], [2], [1], [1], [0, 0, 0, 1, 1, 1], [0], [0]>} : vector<4x8x8xbf16>, vector<4x8x8xbf16>, vector<4x8x8xf32> -> vector<4x8x8xf32>
    "tpu.trace_stop"() : () -> ()
    %c1 = arith.constant 1 : index
    %c0_17 = arith.constant 0 : index
    %c0_18 = arith.constant 0 : index
    %81 = vector.load %arg18[%c1, %c0_17, %c0_18] : memref<2x8x8xf32, #tpu.memory_space<vmem>>, vector<1x8x8xf32>
    %82 = vector.shape_cast %81 : vector<1x8x8xf32> to vector<8x8xf32>
    %83 = vector.shape_cast %82 : vector<8x8xf32> to vector<1x8x8xf32>
    %84 = vector.broadcast %83 : vector<1x8x8xf32> to vector<4x8x8xf32>
    %85 = arith.addf %80, %84 : vector<4x8x8xf32>
    %cst_19 = arith.constant dense<0xFF800000> : vector<4x8xf32>
    %86 = vector.multi_reduction <maximumf>, %85, %cst_19 [2] : vector<4x8x8xf32> to vector<4x8xf32>
    %87 = vector.shape_cast %86 : vector<4x8xf32> to vector<4x8x1xf32>
    %88 = vector.broadcast %87 : vector<4x8x1xf32> to vector<4x8x8xf32>
    %89 = arith.subf %85, %88 : vector<4x8x8xf32>
    %90 = math.exp %89 : vector<4x8x8xf32>
    %cst_20 = arith.constant dense<0.000000e+00> : vector<4x8xf32>
    %91 = vector.multi_reduction <add>, %90, %cst_20 [2] : vector<4x8x8xf32> to vector<4x8xf32>
    %92 = vector.shape_cast %91 : vector<4x8xf32> to vector<4x8x1xf32>
    %93 = tpu.reciprocal %92 {approx = true} : vector<4x8x1xf32> -> vector<4x8x1xf32>
    %94 = vector.broadcast %93 : vector<4x8x1xf32> to vector<4x8x8xf32>
    %95 = arith.mulf %90, %94 : vector<4x8x8xf32>
    %96 = arith.truncf %95 : vector<4x8x8xf32> to vector<4x8x8xbf16>
    "tpu.trace_start"() <{level = 10 : i32, message = "hqk,hkd->hqd"}> : () -> ()
    %cst_21 = arith.constant dense<0.000000e+00> : vector<4x8x8xf32>
    %97 = tpu.matmul %96, %79, %cst_21 {dimension_numbers = #tpu.dot_dimension_numbers<[2], [1], [1], [2], [0, 0, 0, 1, 1, 2], [0], [0]>} : vector<4x8x8xbf16>, vector<4x8x8xbf16>, vector<4x8x8xf32> -> vector<4x8x8xf32>
    "tpu.trace_stop"() : () -> ()
    %98 = vector.extract_strided_slice %97 {offsets = [0, 0, 0], sizes = [1, 8, 8], strides = [1, 1, 1]} : vector<4x8x8xf32> to vector<1x8x8xf32>
    %99 = vector.shape_cast %98 : vector<1x8x8xf32> to vector<8x8xf32>
    %100 = vector.extract_strided_slice %97 {offsets = [1, 0, 0], sizes = [1, 8, 8], strides = [1, 1, 1]} : vector<4x8x8xf32> to vector<1x8x8xf32>
    %101 = vector.shape_cast %100 : vector<1x8x8xf32> to vector<8x8xf32>
    %102 = vector.extract_strided_slice %97 {offsets = [2, 0, 0], sizes = [1, 8, 8], strides = [1, 1, 1]} : vector<4x8x8xf32> to vector<1x8x8xf32>
    %103 = vector.shape_cast %102 : vector<1x8x8xf32> to vector<8x8xf32>
    %104 = vector.extract_strided_slice %97 {offsets = [3, 0, 0], sizes = [1, 8, 8], strides = [1, 1, 1]} : vector<4x8x8xf32> to vector<1x8x8xf32>
    %105 = vector.shape_cast %104 : vector<1x8x8xf32> to vector<8x8xf32>
    %106 = tpu.concatenate %99, %101, %103, %105 in 1 : vector<8x8xf32>, vector<8x8xf32>, vector<8x8xf32>, vector<8x8xf32> -> vector<8x32xf32>
    %107 = tpu.concatenate %76, %106 in 0 : vector<8x32xf32>, vector<8x32xf32> -> vector<16x32xf32>
    %108 = arith.truncf %107 : vector<16x32xf32> to vector<16x32xbf16>
    %c0_22 = arith.constant 0 : index
    %c0_23 = arith.constant 0 : index
    %c0_24 = arith.constant 0 : index
    %109 = vector.load %arg6[%c0_22, %c0_23, %c0_24] : memref<1x32x32xbf16, #tpu.memory_space<vmem>>, vector<1x32x32xbf16>
    %110 = vector.shape_cast %109 : vector<1x32x32xbf16> to vector<32x32xbf16>
    %cst_25 = arith.constant dense<0.000000e+00> : vector<16x32xf32>
    %111 = tpu.matmul %108, %110, %cst_25 {dimension_numbers = #tpu.dot_dimension_numbers<[1], [0], [0], [1], [0, 0, 1, 1], [], []>} : vector<16x32xbf16>, vector<32x32xbf16>, vector<16x32xf32> -> vector<16x32xf32>
    %c0_26 = arith.constant 0 : index
    %c0_27 = arith.constant 0 : index
    %c0_28 = arith.constant 0 : index
    %112 = vector.load %arg7[%c0_26, %c0_27, %c0_28] : memref<1x1x32xf32, #tpu.memory_space<vmem>>, vector<1x1x32xf32>
    %113 = vector.shape_cast %112 : vector<1x1x32xf32> to vector<1x32xf32>
    %114 = vector.broadcast %113 : vector<1x32xf32> to vector<16x32xf32>
    %115 = arith.addf %111, %114 : vector<16x32xf32>
    %116 = arith.addf %3, %115 : vector<16x32xf32>
    %c0_29 = arith.constant 0 : index
    %c0_30 = arith.constant 0 : index
    %c0_31 = arith.constant 0 : index
    %117 = vector.load %arg8[%c0_29, %c0_30, %c0_31] : memref<1x1x32xf32, #tpu.memory_space<vmem>>, vector<1x1x32xf32>
    %118 = vector.shape_cast %117 : vector<1x1x32xf32> to vector<1x32xf32>
    %c0_32 = arith.constant 0 : index
    %c0_33 = arith.constant 0 : index
    %c0_34 = arith.constant 0 : index
    %119 = vector.load %arg9[%c0_32, %c0_33, %c0_34] : memref<1x1x32xf32, #tpu.memory_space<vmem>>, vector<1x1x32xf32>
    %120 = vector.shape_cast %119 : vector<1x1x32xf32> to vector<1x32xf32>
    %cst_35 = arith.constant dense<0.000000e+00> : vector<16xf32>
    %121 = vector.multi_reduction <add>, %116, %cst_35 [1] : vector<16x32xf32> to vector<16xf32>
    %122 = vector.shape_cast %121 : vector<16xf32> to vector<16x1xf32>
    %cst_36 = arith.constant 3.200000e+01 : f32
    %123 = vector.broadcast %cst_36 : f32 to vector<16x1xf32>
    %124 = arith.divf %122, %123 : vector<16x1xf32>
    %125 = vector.broadcast %124 : vector<16x1xf32> to vector<16x32xf32>
    %126 = arith.subf %116, %125 : vector<16x32xf32>
    %127 = arith.mulf %126, %126 : vector<16x32xf32>
    %cst_37 = arith.constant dense<0.000000e+00> : vector<16xf32>
    %128 = vector.multi_reduction <add>, %127, %cst_37 [1] : vector<16x32xf32> to vector<16xf32>
    %129 = vector.shape_cast %128 : vector<16xf32> to vector<16x1xf32>
    %cst_38 = arith.constant 3.200000e+01 : f32
    %130 = vector.broadcast %cst_38 : f32 to vector<16x1xf32>
    %131 = arith.divf %129, %130 : vector<16x1xf32>
    %132 = vector.broadcast %124 : vector<16x1xf32> to vector<16x32xf32>
    %133 = arith.subf %116, %132 : vector<16x32xf32>
    %cst_39 = arith.constant 9.99999974E-6 : f32
    %134 = vector.broadcast %cst_39 : f32 to vector<16x1xf32>
    %135 = arith.addf %131, %134 : vector<16x1xf32>
    %136 = math.rsqrt %135 : vector<16x1xf32>
    %137 = vector.broadcast %136 : vector<16x1xf32> to vector<16x32xf32>
    %138 = arith.mulf %133, %137 : vector<16x32xf32>
    %139 = vector.broadcast %118 : vector<1x32xf32> to vector<16x32xf32>
    %140 = arith.mulf %138, %139 : vector<16x32xf32>
    %141 = vector.broadcast %120 : vector<1x32xf32> to vector<16x32xf32>
    %142 = arith.addf %140, %141 : vector<16x32xf32>
    %143 = arith.truncf %142 : vector<16x32xf32> to vector<16x32xbf16>
    %c0_40 = arith.constant 0 : index
    %c0_41 = arith.constant 0 : index
    %c0_42 = arith.constant 0 : index
    %144 = vector.load %arg10[%c0_40, %c0_41, %c0_42] : memref<1x32x64xbf16, #tpu.memory_space<vmem>>, vector<1x32x64xbf16>
    %145 = vector.shape_cast %144 : vector<1x32x64xbf16> to vector<32x64xbf16>
    %cst_43 = arith.constant dense<0.000000e+00> : vector<16x64xf32>
    %146 = tpu.matmul %143, %145, %cst_43 {dimension_numbers = #tpu.dot_dimension_numbers<[1], [0], [0], [1], [0, 0, 1, 1], [], []>} : vector<16x32xbf16>, vector<32x64xbf16>, vector<16x64xf32> -> vector<16x64xf32>
    %c0_44 = arith.constant 0 : index
    %c0_45 = arith.constant 0 : index
    %c0_46 = arith.constant 0 : index
    %147 = vector.load %arg11[%c0_44, %c0_45, %c0_46] : memref<1x1x64xf32, #tpu.memory_space<vmem>>, vector<1x1x64xf32>
    %148 = vector.shape_cast %147 : vector<1x1x64xf32> to vector<1x64xf32>
    %149 = vector.broadcast %148 : vector<1x64xf32> to vector<16x64xf32>
    %150 = arith.addf %146, %149 : vector<16x64xf32>
    %cst_47 = arith.constant 0.000000e+00 : f32
    %151 = vector.broadcast %cst_47 : f32 to vector<16x64xf32>
    %152 = arith.maximumf %150, %151 : vector<16x64xf32>
    %153 = arith.truncf %152 : vector<16x64xf32> to vector<16x64xbf16>
    %c0_48 = arith.constant 0 : index
    %c0_49 = arith.constant 0 : index
    %c0_50 = arith.constant 0 : index
    %154 = vector.load %arg12[%c0_48, %c0_49, %c0_50] : memref<1x64x32xbf16, #tpu.memory_space<vmem>>, vector<1x64x32xbf16>
    %155 = vector.shape_cast %154 : vector<1x64x32xbf16> to vector<64x32xbf16>
    %cst_51 = arith.constant dense<0.000000e+00> : vector<16x32xf32>
    %156 = tpu.matmul %153, %155, %cst_51 {dimension_numbers = #tpu.dot_dimension_numbers<[1], [0], [0], [1], [0, 0, 1, 1], [], []>} : vector<16x64xbf16>, vector<64x32xbf16>, vector<16x32xf32> -> vector<16x32xf32>
    %c0_52 = arith.constant 0 : index
    %c0_53 = arith.constant 0 : index
    %c0_54 = arith.constant 0 : index
    %157 = vector.load %arg13[%c0_52, %c0_53, %c0_54] : memref<1x1x32xf32, #tpu.memory_space<vmem>>, vector<1x1x32xf32>
    %158 = vector.shape_cast %157 : vector<1x1x32xf32> to vector<1x32xf32>
    %159 = vector.broadcast %158 : vector<1x32xf32> to vector<16x32xf32>
    %160 = arith.addf %156, %159 : vector<16x32xf32>
    %161 = arith.addf %142, %160 : vector<16x32xf32>
    %c0_55 = arith.constant 0 : index
    %c0_56 = arith.constant 0 : index
    %c0_57 = arith.constant 0 : index
    %162 = vector.load %arg14[%c0_55, %c0_56, %c0_57] : memref<1x1x32xf32, #tpu.memory_space<vmem>>, vector<1x1x32xf32>
    %163 = vector.shape_cast %162 : vector<1x1x32xf32> to vector<1x32xf32>
    %c0_58 = arith.constant 0 : index
    %c0_59 = arith.constant 0 : index
    %c0_60 = arith.constant 0 : index
    %164 = vector.load %arg15[%c0_58, %c0_59, %c0_60] : memref<1x1x32xf32, #tpu.memory_space<vmem>>, vector<1x1x32xf32>
    %165 = vector.shape_cast %164 : vector<1x1x32xf32> to vector<1x32xf32>
    %cst_61 = arith.constant dense<0.000000e+00> : vector<16xf32>
    %166 = vector.multi_reduction <add>, %161, %cst_61 [1] : vector<16x32xf32> to vector<16xf32>
    %167 = vector.shape_cast %166 : vector<16xf32> to vector<16x1xf32>
    %cst_62 = arith.constant 3.200000e+01 : f32
    %168 = vector.broadcast %cst_62 : f32 to vector<16x1xf32>
    %169 = arith.divf %167, %168 : vector<16x1xf32>
    %170 = vector.broadcast %169 : vector<16x1xf32> to vector<16x32xf32>
    %171 = arith.subf %161, %170 : vector<16x32xf32>
    %172 = arith.mulf %171, %171 : vector<16x32xf32>
    %cst_63 = arith.constant dense<0.000000e+00> : vector<16xf32>
    %173 = vector.multi_reduction <add>, %172, %cst_63 [1] : vector<16x32xf32> to vector<16xf32>
    %174 = vector.shape_cast %173 : vector<16xf32> to vector<16x1xf32>
    %cst_64 = arith.constant 3.200000e+01 : f32
    %175 = vector.broadcast %cst_64 : f32 to vector<16x1xf32>
    %176 = arith.divf %174, %175 : vector<16x1xf32>
    %177 = vector.broadcast %169 : vector<16x1xf32> to vector<16x32xf32>
    %178 = arith.subf %161, %177 : vector<16x32xf32>
    %cst_65 = arith.constant 9.99999974E-6 : f32
    %179 = vector.broadcast %cst_65 : f32 to vector<16x1xf32>
    %180 = arith.addf %176, %179 : vector<16x1xf32>
    %181 = math.rsqrt %180 : vector<16x1xf32>
    %182 = vector.broadcast %181 : vector<16x1xf32> to vector<16x32xf32>
    %183 = arith.mulf %178, %182 : vector<16x32xf32>
    %184 = vector.broadcast %163 : vector<1x32xf32> to vector<16x32xf32>
    %185 = arith.mulf %183, %184 : vector<16x32xf32>
    %186 = vector.broadcast %165 : vector<1x32xf32> to vector<16x32xf32>
    %187 = arith.addf %185, %186 : vector<16x32xf32>
    %c0_66 = arith.constant 0 : index
    %c0_67 = arith.constant 0 : index
    %188 = vector.load %arg17[%c0_66, %c0_67] : memref<16x32xf32, #tpu.memory_space<vmem>>, vector<16x32xf32>
    tpu.vector_store %arg17[%c0_66, %c0_67], %187 {strides = array<i32>} : memref<16x32xf32, #tpu.memory_space<vmem>>, vector<16x32xf32>,
    %c1_i32 = arith.constant 1 : i32
    %189 = arith.cmpi eq, %arg1, %c1_i32 : i32
    %190 = arith.extui %189 : i1 to i32
    %c0_i32_68 = arith.constant 0 : i32
    %191 = arith.cmpi ne, %190, %c0_i32_68 : i32
    scf.if %191 {
      %192 = vector.extract_strided_slice %187 {offsets = [0, 0], sizes = [8, 32], strides = [1, 1]} : vector<16x32xf32> to vector<8x32xf32>
      %193 = arith.truncf %192 : vector<8x32xf32> to vector<8x32xbf16>
      %c0_69 = arith.constant 0 : index
      %c0_70 = arith.constant 0 : index
      %c0_71 = arith.constant 0 : index
      %194 = vector.load %arg16[%c0_69, %c0_70, %c0_71] : memref<2x8x32xbf16, #tpu.memory_space<vmem>>, vector<1x8x32xbf16>
      %195 = vector.shape_cast %194 : vector<1x8x32xbf16> to vector<8x32xbf16>
      %196 = vector.shape_cast %193 : vector<8x32xbf16> to vector<1x8x32xbf16>
      tpu.vector_store %arg16[%c0_69, %c0_70, %c0_71], %196 {strides = array<i32>} : memref<2x8x32xbf16, #tpu.memory_space<vmem>>, vector<1x8x32xbf16>,
      %197 = vector.extract_strided_slice %187 {offsets = [8, 0], sizes = [8, 32], strides = [1, 1]} : vector<16x32xf32> to vector<8x32xf32>
      %198 = arith.truncf %197 : vector<8x32xf32> to vector<8x32xbf16>
      %c1_72 = arith.constant 1 : index
      %c0_73 = arith.constant 0 : index
      %c0_74 = arith.constant 0 : index
      %199 = vector.load %arg16[%c1_72, %c0_73, %c0_74] : memref<2x8x32xbf16, #tpu.memory_space<vmem>>, vector<1x8x32xbf16>
      %200 = vector.shape_cast %199 : vector<1x8x32xbf16> to vector<8x32xbf16>
      %201 = vector.shape_cast %198 : vector<8x32xbf16> to vector<1x8x32xbf16>
      tpu.vector_store %arg16[%c1_72, %c0_73, %c0_74], %201 {strides = array<i32>} : memref<2x8x32xbf16, #tpu.memory_space<vmem>>, vector<1x8x32xbf16>,
    } else {
    }
    return
  }
  func.func @transform_0(%arg0: i32, %arg1: i32) -> (i32, i32, i32) {
    %c0_i32 = arith.constant 0 : i32
    %c0_i32_0 = arith.constant 0 : i32
    %c0_i32_1 = arith.constant 0 : i32
    return %arg0, %c0_i32, %c0_i32_0 : i32, i32, i32
  }
  func.func @transform_1(%arg0: i32, %arg1: i32) -> (i32, i32, i32) {
    %c0_i32 = arith.constant 0 : i32
    %c0_i32_0 = arith.constant 0 : i32
    %c0_i32_1 = arith.constant 0 : i32
    return %arg0, %c0_i32, %c0_i32_0 : i32, i32, i32
  }
  func.func @transform_2(%arg0: i32, %arg1: i32) -> (i32, i32, i32) {
    %c0_i32 = arith.constant 0 : i32
    %c0_i32_0 = arith.constant 0 : i32
    %c0_i32_1 = arith.constant 0 : i32
    return %arg1, %c0_i32, %c0_i32_0 : i32, i32, i32
  }
  func.func @transform_3(%arg0: i32, %arg1: i32) -> (i32, i32, i32) {
    %c0_i32 = arith.constant 0 : i32
    %c0_i32_0 = arith.constant 0 : i32
    %c0_i32_1 = arith.constant 0 : i32
    return %arg1, %c0_i32, %c0_i32_0 : i32, i32, i32
  }
  func.func @transform_4(%arg0: i32, %arg1: i32) -> (i32, i32, i32) {
    %c0_i32 = arith.constant 0 : i32
    %c0_i32_0 = arith.constant 0 : i32
    %c0_i32_1 = arith.constant 0 : i32
    return %arg1, %c0_i32, %c0_i32_0 : i32, i32, i32
  }
  func.func @transform_5(%arg0: i32, %arg1: i32) -> (i32, i32, i32) {
    %c0_i32 = arith.constant 0 : i32
    %c0_i32_0 = arith.constant 0 : i32
    %c0_i32_1 = arith.constant 0 : i32
    return %arg1, %c0_i32, %c0_i32_0 : i32, i32, i32
  }
  func.func @transform_6(%arg0: i32, %arg1: i32) -> (i32, i32, i32) {
    %c0_i32 = arith.constant 0 : i32
    %c0_i32_0 = arith.constant 0 : i32
    %c0_i32_1 = arith.constant 0 : i32
    return %arg1, %c0_i32, %c0_i32_0 : i32, i32, i32
  }
  func.func @transform_7(%arg0: i32, %arg1: i32) -> (i32, i32, i32) {
    %c0_i32 = arith.constant 0 : i32
    %c0_i32_0 = arith.constant 0 : i32
    %c0_i32_1 = arith.constant 0 : i32
    return %arg1, %c0_i32, %c0_i32_0 : i32, i32, i32
  }
  func.func @transform_8(%arg0: i32, %arg1: i32) -> (i32, i32, i32) {
    %c0_i32 = arith.constant 0 : i32
    %c0_i32_0 = arith.constant 0 : i32
    %c0_i32_1 = arith.constant 0 : i32
    return %arg1, %c0_i32, %c0_i32_0 : i32, i32, i32
  }
  func.func @transform_9(%arg0: i32, %arg1: i32) -> (i32, i32, i32) {
    %c0_i32 = arith.constant 0 : i32
    %c0_i32_0 = arith.constant 0 : i32
    %c0_i32_1 = arith.constant 0 : i32
    return %arg1, %c0_i32, %c0_i32_0 : i32, i32, i32
  }
  func.func @transform_10(%arg0: i32, %arg1: i32) -> (i32, i32, i32) {
    %c0_i32 = arith.constant 0 : i32
    %c0_i32_0 = arith.constant 0 : i32
    %c0_i32_1 = arith.constant 0 : i32
    return %arg1, %c0_i32, %c0_i32_0 : i32, i32, i32
  }
  func.func @transform_11(%arg0: i32, %arg1: i32) -> (i32, i32, i32) {
    %c0_i32 = arith.constant 0 : i32
    %c0_i32_0 = arith.constant 0 : i32
    %c0_i32_1 = arith.constant 0 : i32
    return %arg1, %c0_i32, %c0_i32_0 : i32, i32, i32
  }
  func.func @transform_12(%arg0: i32, %arg1: i32) -> (i32, i32, i32) {
    %c0_i32 = arith.constant 0 : i32
    %c0_i32_0 = arith.constant 0 : i32
    %c0_i32_1 = arith.constant 0 : i32
    return %arg1, %c0_i32, %c0_i32_0 : i32, i32, i32
  }
  func.func @transform_13(%arg0: i32, %arg1: i32) -> (i32, i32, i32) {
    %c0_i32 = arith.constant 0 : i32
    %c0_i32_0 = arith.constant 0 : i32
    %c0_i32_1 = arith.constant 0 : i32
    return %arg1, %c0_i32, %c0_i32_0 : i32, i32, i32
  }
  func.func @transform_14(%arg0: i32, %arg1: i32) -> (i32, i32, i32) {
    %c0_i32 = arith.constant 0 : i32
    %c0_i32_0 = arith.constant 0 : i32
    %c0_i32_1 = arith.constant 0 : i32
    return %arg0, %c0_i32, %c0_i32_0 : i32, i32, i32
  }
}

</mosaic_0001>

<llo_original>
// kernel: lm_forward.3
$region0: #{lm_forward.3}
  #allocation0 [shape = 'u32[]', space=smem, size = 0x4, offset = 0x4, fixed_abs, tag = 'smem constant byte address 0x4 - core index']
  #allocation1 [shape = 'u32[144,128]{1,0:T(1,128)}', space=vmem, size = 0x12000, scoped, tag = 'internal scratch']
  %s0 = inlined_call_operand.vmem [shape: bf16[32,32], index: 0, kind: input, shape index: {}]
  %s1 = inlined_call_operand.vmem [shape: bf16[32,256], index: 1, kind: input, shape index: {}]
  %s2 = inlined_call_operand.vmem [shape: f32[1,256], index: 2, kind: input, shape index: {}]
  %s3 = inlined_call_operand.vmem [shape: f32[32,256], index: 3, kind: output, shape index: {}]
  %s4 = sld [smem:[#allocation0]]
  $region22: #{lm_forward.3} parent=0
    _
  %s6 = ssub.s32 1, %s4
  %s7 = scalar_select 0, %s6, %s4
  // Predicated region
  $region2: #{lm_forward.3} parent=0 // pred_check
    _
  $region3: #{lm_forward.3} parent=0 // pred_check_branch
    %9 = sbr.rel (0) target = $region5
  $region4: #{lm_forward.3} parent=0 // pred_region
    _
  $region5: #{lm_forward.3} parent=0 // pred_fallthru
    _
  // Predicated region
  $region6: #{lm_forward.3} parent=0 // pred_check
    _
  $region7: #{lm_forward.3} parent=0 // pred_check_branch
    %11 = sbr.rel (0) target = $region9
  $region8: #{lm_forward.3} parent=0 // pred_region
    _
  $region9: #{lm_forward.3} parent=0 // pred_fallthru
    _
  // Predicated region
  $region10: #{lm_forward.3} parent=0 // pred_check
    _
  $region11: #{lm_forward.3} parent=0 // pred_check_branch
    %13 = sbr.rel (0) target = $region13
  $region12: #{lm_forward.3} parent=0 // pred_region
    _
  $region13: #{lm_forward.3} parent=0 // pred_fallthru
    _
  %v15 = vld [vmem:[%s0] sm:$0xf]
  %v16 = vld [vmem:[%s0 + $0x4] sm:$0xf]
  %v17 = vld [vmem:[%s0 + $0x8] sm:$0xf]
  %v18 = vld [vmem:[%s0 + $0xc] sm:$0xf]
  %v19 = vld [vmem:[%s1] sm:$0xff]
  %v20 = vld [vmem:[%s1 + $0x8] sm:$0xff]
  %v21 = vld [vmem:[%s1 + $0x10] sm:$0xff]
  %v22 = vld [vmem:[%s1 + $0x18] sm:$0xff]
  %v23 = vld [vmem:[%s2] sm:$0x3]
  %v25 = vlaneseq
  %v26 = vshrl.u32 %v25, 7
  %v27 = vsub.s32 0, %v26
  %v28 = vrot.slane %v23, %v27
  %v29 = vlaneseq
  %v30 = vshrl.u32 %v29, 7
  %v31 = vsub.s32 1, %v30
  %v32 = vrot.slane %v23, %v31
  %v39 = vunpack.c.l.b16 %v15
  %v40 = vunpack.c.l.b16 %v16
  %v41 = vunpack.c.l.b16 %v17
  %v42 = vunpack.c.l.b16 %v18
  %v43 = vpack.c.b16 %v40, %v39
  %v44 = vpack.c.b16 %v42, %v41
  %v49 = vunpack.c.l.b16 %v19
  %v50 = vunpack.c.h.b16 %v19
  %v51 = vunpack.c.l.b16 %v20
  %v52 = vunpack.c.h.b16 %v20
  %v53 = vunpack.c.l.b16 %v21
  %v54 = vunpack.c.h.b16 %v21
  %v55 = vunpack.c.l.b16 %v22
  %v56 = vunpack.c.h.b16 %v22
  %v57 = vpack.c.b16 %v51, %v49
  %v58 = vpack.c.b16 %v52, %v50
  %v59 = vpack.c.b16 %v55, %v53
  %v60 = vpack.c.b16 %v56, %v54
  %vm65 = vcmask 261120
  %v67 = vsel %vm65, %v43, 0
  %v70 = vsel %vm65, %v44, 0
  %72 = vmatprep.subr.bf16.mxu0 %v58
  %73 = vmatpush1.bf16.msra.mxu0 %v57
  %74 = vmatprep.subr.bf16.mxu0 %v60
  %75 = vmatpush1.bf16.msra.mxu0 %v59
  %76 = vmatprep.subr.bf16.mxu0 0
  %77 = vmatpush1.bf16.msra.mxu0 0
  %78 = vmatprep.subr.bf16.mxu0 0
  %79 = vmatpush1.bf16.msra.mxu0 0
  %80 = vmatprep.subr.bf16.mxu0 0
  %81 = vmatpush1.bf16.msra.mxu0 0
  %82 = vmatprep.subr.bf16.mxu0 0
  %83 = vmatpush1.bf16.msra.mxu0 0
  %84 = vmatprep.subr.bf16.mxu0 0
  %85 = vmatpush1.bf16.msra.mxu0 0
  %86 = vmatprep.subr.bf16.mxu0 0
  %87 = vmatpush1.bf16.msra.mxu0 0
  %88 = vmatprep.subr.bf16.mxu0 0
  %89 = vmatpush1.bf16.msra.mxu0 0
  %90 = vmatprep.subr.bf16.mxu0 0
  %91 = vmatpush1.bf16.msra.mxu0 0
  %92 = vmatprep.subr.bf16.mxu0 0
  %93 = vmatpush1.bf16.msra.mxu0 0
  %94 = vmatprep.subr.bf16.mxu0 0
  %95 = vmatpush1.bf16.msra.mxu0 0
  %96 = vmatprep.subr.bf16.mxu0 0
  %97 = vmatpush1.bf16.msra.mxu0 0
  %98 = vmatprep.subr.bf16.mxu0 0
  %99 = vmatpush1.bf16.msra.mxu0 0
  %100 = vmatprep.subr.bf16.mxu0 0
  %101 = vmatpush1.bf16.msra.mxu0 0
  %102 = vmatprep.subr.bf16.mxu0 0
  %103 = vmatpush1.bf16.msra.mxu0 0
  %104 = vmatprep.mubr.bf16.mxu0 0
  %105 = vmatmul.mubr.bf16.gmra.mrb[0].mxu0 %v67
  %v106 = vpop.f32.mrb[0].mxu0
  %v107 = vadd.f32 %v28, %v106
  %v108 = vpop.f32.mrb[0].mxu0
  %v109 = vadd.f32 %v32, %v108
  %v110 = vpop.f32.mrb[0].mxu0
  %v111 = vadd.f32 %v28, %v110
  %v112 = vpop.f32.mrb[0].mxu0
  %v113 = vadd.f32 %v32, %v112
  %114 = vmatprep.mubr.bf16.mxu0 0
  %115 = vmatmul.mubr.bf16.gmra.mrb[0].mxu0 %v70
  %v116 = vpop.f32.mrb[0].mxu0
  %v117 = vadd.f32 %v28, %v116
  %v118 = vpop.f32.mrb[0].mxu0
  %v119 = vadd.f32 %v32, %v118
  %v120 = vpop.f32.mrb[0].mxu0
  %v121 = vadd.f32 %v28, %v120
  %v122 = vpop.f32.mrb[0].mxu0
  %v123 = vadd.f32 %v32, %v122
  %124 = vdwg.mxu0
  %125 = vst [vmem:[%s3] sm:$0xff] %v107
  %126 = vst [vmem:[%s3 + $0x8] sm:$0xff] %v109
  %127 = vst [vmem:[%s3 + $0x10] sm:$0xff] %v111
  %128 = vst [vmem:[%s3 + $0x18] sm:$0xff] %v113
  %129 = vst [vmem:[%s3 + $0x20] sm:$0xff] %v117
  %130 = vst [vmem:[%s3 + $0x28] sm:$0xff] %v119
  %131 = vst [vmem:[%s3 + $0x30] sm:$0xff] %v121
  %132 = vst [vmem:[%s3 + $0x38] sm:$0xff] %v123
  // Predicated region
  $region14: #{lm_forward.3} parent=0 // pred_check
    _
  $region15: #{lm_forward.3} parent=0 // pred_check_branch
    %134 = sbr.rel (0) target = $region17
  $region16: #{lm_forward.3} parent=0 // pred_region
    _
  $region17: #{lm_forward.3} parent=0 // pred_fallthru
    _
  // Predicated region
  $region18: #{lm_forward.3} parent=0 // pred_check
    _
  $region19: #{lm_forward.3} parent=0 // pred_check_branch
    %136 = sbr.rel (0) target = $region21
  $region20: #{lm_forward.3} parent=0 // pred_region
    _
  $region21: #{lm_forward.3} parent=0 // pred_fallthru
    _

// kernel: lm_forward.2
$region0: #{lm_forward.2}
  #allocation0 [shape = 'u32[]', space=smem, size = 0x4, offset = 0x4, fixed_abs, tag = 'smem constant byte address 0x4 - core index']
  #allocation1 [shape = 'u32[144,128]{1,0:T(1,128)}', space=vmem, size = 0x12000, scoped, tag = 'internal scratch']
  #allocation2 [shape = 'f32[16,32]{1,0:T(8,128)}', space=vmem, size = 0x2000, scoped, tag = 'scratch operand']
  #allocation3 [shape = 'f32[2,8,8]{2,1,0:T(8,128)}', space=vmem, size = 0x2000, scoped, tag = 'scratch operand']
  %s0 = inlined_call_operand.vmem [shape: s32[4,1,8], index: 0, kind: input, shape index: {}]
  %s1 = inlined_call_operand.vmem [shape: bf16[4,8,32], index: 1, kind: input, shape index: {}]
  %s2 = inlined_call_operand.vmem [shape: bf16[2,32,96], index: 2, kind: input, shape index: {}]
  %s3 = inlined_call_operand.vmem [shape: f32[2,1,96], index: 3, kind: input, shape index: {}]
  %s4 = inlined_call_operand.vmem [shape: bf16[2,32,32], index: 4, kind: input, shape index: {}]
  %s5 = inlined_call_operand.vmem [shape: f32[2,1,32], index: 5, kind: input, shape index: {}]
  %s6 = inlined_call_operand.vmem [shape: f32[2,1,32], index: 6, kind: input, shape index: {}]
  %s7 = inlined_call_operand.vmem [shape: f32[2,1,32], index: 7, kind: input, shape index: {}]
  %s8 = inlined_call_operand.vmem [shape: bf16[2,32,64], index: 8, kind: input, shape index: {}]
  %s9 = inlined_call_operand.vmem [shape: f32[2,1,64], index: 9, kind: input, shape index: {}]
  %s10 = inlined_call_operand.vmem [shape: bf16[2,64,32], index: 10, kind: input, shape index: {}]
  %s11 = inlined_call_operand.vmem [shape: f32[2,1,32], index: 11, kind: input, shape index: {}]
  %s12 = inlined_call_operand.vmem [shape: f32[2,1,32], index: 12, kind: input, shape index: {}]
  %s13 = inlined_call_operand.vmem [shape: f32[2,1,32], index: 13, kind: input, shape index: {}]
  %s14 = inlined_call_operand.vmem [shape: bf16[4,8,32], index: 14, kind: output, shape index: {}]
  %s15 = sld [smem:[#allocation0]]
  $region97: #{lm_forward.2} parent=0
    _
  %s17 = ssub.s32 1, %s15
  %s18 = scalar_select 0, %s17, %s15
  loop: start=0, step=1, limit=6
  $region2: #{lm_forward.2} parent=0 // loop_pre_header
    _
  $region3: #{lm_forward.2} parent=0 // loop_header
    %s20 = sphi 0, %s24
    %p21 = scmp.ge.s32.totalorder %s20, 6
    %s27 = sphi 0, %s39
    %s28 = sphi 0, %s35
    %s29 = sphi 0, %s27
    %s30 = sphi 0, %s28
    %s31 = sphi 0, %s29
    %s32 = sphi 0, %s30
    %s42 = sphi 0, %s44
    %s45 = sphi 0, %s42
    %s46 = sphi 0, %s45
    %s62 = sphi 0, %s46
    %s68 = sphi 0, %s70
    %s71 = sphi 0, %s68
    %s72 = sphi 0, %s71
    %s88 = sphi 0, %s72
    %s94 = sphi 0, %s96
    %s97 = sphi 0, %s94
    %s98 = sphi 0, %s97
    %s114 = sphi 0, %s98
    %s120 = sphi 0, %s122
    %s123 = sphi 0, %s120
    %s124 = sphi 0, %s123
    %s140 = sphi 0, %s124
    %s146 = sphi 0, %s148
    %s149 = sphi 0, %s146
    %s150 = sphi 0, %s149
    %s166 = sphi 0, %s150
    %s172 = sphi 0, %s174
    %s175 = sphi 0, %s172
    %s176 = sphi 0, %s175
    %s192 = sphi 0, %s176
    %s198 = sphi 0, %s200
    %s201 = sphi 0, %s198
    %s202 = sphi 0, %s201
    %s218 = sphi 0, %s202
    %s224 = sphi 0, %s226
    %s227 = sphi 0, %s224
    %s228 = sphi 0, %s227
    %s244 = sphi 0, %s228
    %s250 = sphi 0, %s252
    %s253 = sphi 0, %s250
    %s254 = sphi 0, %s253
    %s270 = sphi 0, %s254
    %s276 = sphi 0, %s278
    %s279 = sphi 0, %s276
    %s280 = sphi 0, %s279
    %s296 = sphi 0, %s280
    %s302 = sphi 0, %s304
    %s305 = sphi 0, %s302
    %s306 = sphi 0, %s305
    %s322 = sphi 0, %s306
    %s328 = sphi 0, %s330
    %s331 = sphi 0, %s328
    %s332 = sphi 0, %s331
    %s348 = sphi 0, %s332
    %s354 = sphi 0, %s356
    %s357 = sphi 0, %s354
    %s358 = sphi 0, %s357
    %s374 = sphi 0, %s358
    %s380 = sphi 0, %s382
    %s383 = sphi 0, %s380
    %s384 = sphi 0, %s383
    %s400 = sphi 0, %s384
    %s406 = sphi 0, %s408
    %s409 = sphi 0, %s406
    %s410 = sphi 0, %s409
    %s426 = sphi 0, %s410
  $region4: #{lm_forward.2} parent=0 // loop_header_branch
    %23 = sbr.rel (%p21) target = $region8
  $region5: #{lm_forward.2} parent=0 // loop_body
    %s25 = ssub.s32 %s20, 1
    %s26 = ssub.s32 %s20, 2
    %s33 = sadd.s32 1, %s28
    %p34 = scmp.ge.s32.totalorder %s33, 2
    %s35 = scalar_select %p34, 0, %s33
    %s36 = sadd.s32 1, %s27
    %s37 = scalar_select %p34, %s36, %s27
    %p38 = scmp.ge.s32.totalorder %s37, 2
    %s39 = scalar_select %p38, 0, %s37
    %s40 = ssub.s32 %s27, %s39
    %p41 = scmp.eq.s32.totalorder %s40, 0
    %s43 = sadd.s32 %s42, 1
    %s44 = scalar_select %p41, %s42, %s43
    %p47 = pneg %p41
    %p48 = scmp.eq.s32.totalorder %s20, 3
    %p49 = por %p47, %p48
    %p50 = scmp.ne.s32.totalorder %s42, %s45
    %p51 = scmp.eq.s32.totalorder %s20, 0
    %p52 = por %p50, %p51
    %p53 = scmp.ne.s32.totalorder %s42, %s45
    %p54 = scmp.eq.s32.totalorder %s25, 3
    %p55 = por %p53, %p54
    %p56 = scmp.ne.s32.totalorder %s45, %s46
    %p57 = scmp.eq.s32.totalorder %s25, 0
    %p58 = por %p56, %p57
    %p59 = scmp.ne.s32.totalorder %s45, %s46
    %p60 = scmp.eq.s32.totalorder %s26, 3
    %p61 = por %p59, %p60
    %p63 = scmp.ne.s32.totalorder %s46, %s62
    %p64 = scmp.eq.s32.totalorder %s26, 0
    %p65 = por %p63, %p64
    %s66 = ssub.s32 %s27, %s39
    %p67 = scmp.eq.s32.totalorder %s66, 0
    %s69 = sadd.s32 %s68, 1
    %s70 = scalar_select %p67, %s68, %s69
    %p73 = pneg %p67
    %p74 = scmp.eq.s32.totalorder %s20, 3
    %p75 = por %p73, %p74
    %p76 = scmp.ne.s32.totalorder %s68, %s71
    %p77 = scmp.eq.s32.totalorder %s20, 0
    %p78 = por %p76, %p77
    %p79 = scmp.ne.s32.totalorder %s68, %s71
    %p80 = scmp.eq.s32.totalorder %s25, 3
    %p81 = por %p79, %p80
    %p82 = scmp.ne.s32.totalorder %s71, %s72
    %p83 = scmp.eq.s32.totalorder %s25, 0
    %p84 = por %p82, %p83
    %p85 = scmp.ne.s32.totalorder %s71, %s72
    %p86 = scmp.eq.s32.totalorder %s26, 3
    %p87 = por %p85, %p86
    %p89 = scmp.ne.s32.totalorder %s72, %s88
    %p90 = scmp.eq.s32.totalorder %s26, 0
    %p91 = por %p89, %p90
    %s92 = ssub.s32 %s28, %s35
    %p93 = scmp.eq.s32.totalorder %s92, 0
    %s95 = sadd.s32 %s94, 1
    %s96 = scalar_select %p93, %s94, %s95
    %p99 = pneg %p93
    %p100 = scmp.eq.s32.totalorder %s20, 3
    %p101 = por %p99, %p100
    %p102 = scmp.ne.s32.totalorder %s94, %s97
    %p103 = scmp.eq.s32.totalorder %s20, 0
    %p104 = por %p102, %p103
    %p105 = scmp.ne.s32.totalorder %s94, %s97
    %p106 = scmp.eq.s32.totalorder %s25, 3
    %p107 = por %p105, %p106
    %p108 = scmp.ne.s32.totalorder %s97, %s98
    %p109 = scmp.eq.s32.totalorder %s25, 0
    %p110 = por %p108, %p109
    %p111 = scmp.ne.s32.totalorder %s97, %s98
    %p112 = scmp.eq.s32.totalorder %s26, 3
    %p113 = por %p111, %p112
    %p115 = scmp.ne.s32.totalorder %s98, %s114
    %p116 = scmp.eq.s32.totalorder %s26, 0
    %p117 = por %p115, %p116
    %s118 = ssub.s32 %s28, %s35
    %p119 = scmp.eq.s32.totalorder %s118, 0
    %s121 = sadd.s32 %s120, 1
    %s122 = scalar_select %p119, %s120, %s121
    %p125 = pneg %p119
    %p126 = scmp.eq.s32.totalorder %s20, 3
    %p127 = por %p125, %p126
    %p128 = scmp.ne.s32.totalorder %s120, %s123
    %p129 = scmp.eq.s32.totalorder %s20, 0
    %p130 = por %p128, %p129
    %p131 = scmp.ne.s32.totalorder %s120, %s123
    %p132 = scmp.eq.s32.totalorder %s25, 3
    %p133 = por %p131, %p132
    %p134 = scmp.ne.s32.totalorder %s123, %s124
    %p135 = scmp.eq.s32.totalorder %s25, 0
    %p136 = por %p134, %p135
    %p137 = scmp.ne.s32.totalorder %s123, %s124
    %p138 = scmp.eq.s32.totalorder %s26, 3
    %p139 = por %p137, %p138
    %p141 = scmp.ne.s32.totalorder %s124, %s140
    %p142 = scmp.eq.s32.totalorder %s26, 0
    %p143 = por %p141, %p142
    %s144 = ssub.s32 %s28, %s35
    %p145 = scmp.eq.s32.totalorder %s144, 0
    %s147 = sadd.s32 %s146, 1
    %s148 = scalar_select %p145, %s146, %s147
    %p151 = pneg %p145
    %p152 = scmp.eq.s32.totalorder %s20, 3
    %p153 = por %p151, %p152
    %p154 = scmp.ne.s32.totalorder %s146, %s149
    %p155 = scmp.eq.s32.totalorder %s20, 0
    %p156 = por %p154, %p155
    %p157 = scmp.ne.s32.totalorder %s146, %s149
    %p158 = scmp.eq.s32.totalorder %s25, 3
    %p159 = por %p157, %p158
    %p160 = scmp.ne.s32.totalorder %s149, %s150
    %p161 = scmp.eq.s32.totalorder %s25, 0
    %p162 = por %p160, %p161
    %p163 = scmp.ne.s32.totalorder %s149, %s150
    %p164 = scmp.eq.s32.totalorder %s26, 3
    %p165 = por %p163, %p164
    %p167 = scmp.ne.s32.totalorder %s150, %s166
    %p168 = scmp.eq.s32.totalorder %s26, 0
    %p169 = por %p167, %p168
    %s170 = ssub.s32 %s28, %s35
    %p171 = scmp.eq.s32.totalorder %s170, 0
    %s173 = sadd.s32 %s172, 1
    %s174 = scalar_select %p171, %s172, %s173
    %p177 = pneg %p171
    %p178 = scmp.eq.s32.totalorder %s20, 3
    %p179 = por %p177, %p178
    %p180 = scmp.ne.s32.totalorder %s172, %s175
    %p181 = scmp.eq.s32.totalorder %s20, 0
    %p182 = por %p180, %p181
    %p183 = scmp.ne.s32.totalorder %s172, %s175
    %p184 = scmp.eq.s32.totalorder %s25, 3
    %p185 = por %p183, %p184
    %p186 = scmp.ne.s32.totalorder %s175, %s176
    %p187 = scmp.eq.s32.totalorder %s25, 0
    %p188 = por %p186, %p187
    %p189 = scmp.ne.s32.totalorder %s175, %s176
    %p190 = scmp.eq.s32.totalorder %s26, 3
    %p191 = por %p189, %p190
    %p193 = scmp.ne.s32.totalorder %s176, %s192
    %p194 = scmp.eq.s32.totalorder %s26, 0
    %p195 = por %p193, %p194
    %s196 = ssub.s32 %s28, %s35
    %p197 = scmp.eq.s32.totalorder %s196, 0
    %s199 = sadd.s32 %s198, 1
    %s200 = scalar_select %p197, %s198, %s199
    %p203 = pneg %p197
    %p204 = scmp.eq.s32.totalorder %s20, 3
    %p205 = por %p203, %p204
    %p206 = scmp.ne.s32.totalorder %s198, %s201
    %p207 = scmp.eq.s32.totalorder %s20, 0
    %p208 = por %p206, %p207
    %p209 = scmp.ne.s32.totalorder %s198, %s201
    %p210 = scmp.eq.s32.totalorder %s25, 3
    %p211 = por %p209, %p210
    %p212 = scmp.ne.s32.totalorder %s201, %s202
    %p213 = scmp.eq.s32.totalorder %s25, 0
    %p214 = por %p212, %p213
    %p215 = scmp.ne.s32.totalorder %s201, %s202
    %p216 = scmp.eq.s32.totalorder %s26, 3
    %p217 = por %p215, %p216
    %p219 = scmp.ne.s32.totalorder %s202, %s218
    %p220 = scmp.eq.s32.totalorder %s26, 0
    %p221 = por %p219, %p220
    %s222 = ssub.s32 %s28, %s35
    %p223 = scmp.eq.s32.totalorder %s222, 0
    %s225 = sadd.s32 %s224, 1
    %s226 = scalar_select %p223, %s224, %s225
    %p229 = pneg %p223
    %p230 = scmp.eq.s32.totalorder %s20, 3
    %p231 = por %p229, %p230
    %p232 = scmp.ne.s32.totalorder %s224, %s227
    %p233 = scmp.eq.s32.totalorder %s20, 0
    %p234 = por %p232, %p233
    %p235 = scmp.ne.s32.totalorder %s224, %s227
    %p236 = scmp.eq.s32.totalorder %s25, 3
    %p237 = por %p235, %p236
    %p238 = scmp.ne.s32.totalorder %s227, %s228
    %p239 = scmp.eq.s32.totalorder %s25, 0
    %p240 = por %p238, %p239
    %p241 = scmp.ne.s32.totalorder %s227, %s228
    %p242 = scmp.eq.s32.totalorder %s26, 3
    %p243 = por %p241, %p242
    %p245 = scmp.ne.s32.totalorder %s228, %s244
    %p246 = scmp.eq.s32.totalorder %s26, 0
    %p247 = por %p245, %p246
    %s248 = ssub.s32 %s28, %s35
    %p249 = scmp.eq.s32.totalorder %s248, 0
    %s251 = sadd.s32 %s250, 1
    %s252 = scalar_select %p249, %s250, %s251
    %p255 = pneg %p249
    %p256 = scmp.eq.s32.totalorder %s20, 3
    %p257 = por %p255, %p256
    %p258 = scmp.ne.s32.totalorder %s250, %s253
    %p259 = scmp.eq.s32.totalorder %s20, 0
    %p260 = por %p258, %p259
    %p261 = scmp.ne.s32.totalorder %s250, %s253
    %p262 = scmp.eq.s32.totalorder %s25, 3
    %p263 = por %p261, %p262
    %p264 = scmp.ne.s32.totalorder %s253, %s254
    %p265 = scmp.eq.s32.totalorder %s25, 0
    %p266 = por %p264, %p265
    %p267 = scmp.ne.s32.totalorder %s253, %s254
    %p268 = scmp.eq.s32.totalorder %s26, 3
    %p269 = por %p267, %p268
    %p271 = scmp.ne.s32.totalorder %s254, %s270
    %p272 = scmp.eq.s32.totalorder %s26, 0
    %p273 = por %p271, %p272
    %s274 = ssub.s32 %s28, %s35
    %p275 = scmp.eq.s32.totalorder %s274, 0
    %s277 = sadd.s32 %s276, 1
    %s278 = scalar_select %p275, %s276, %s277
    %p281 = pneg %p275
    %p282 = scmp.eq.s32.totalorder %s20, 3
    %p283 = por %p281, %p282
    %p284 = scmp.ne.s32.totalorder %s276, %s279
    %p285 = scmp.eq.s32.totalorder %s20, 0
    %p286 = por %p284, %p285
    %p287 = scmp.ne.s32.totalorder %s276, %s279
    %p288 = scmp.eq.s32.totalorder %s25, 3
    %p289 = por %p287, %p288
    %p290 = scmp.ne.s32.totalorder %s279, %s280
    %p291 = scmp.eq.s32.totalorder %s25, 0
    %p292 = por %p290, %p291
    %p293 = scmp.ne.s32.totalorder %s279, %s280
    %p294 = scmp.eq.s32.totalorder %s26, 3
    %p295 = por %p293, %p294
    %p297 = scmp.ne.s32.totalorder %s280, %s296
    %p298 = scmp.eq.s32.totalorder %s26, 0
    %p299 = por %p297, %p298
    %s300 = ssub.s32 %s28, %s35
    %p301 = scmp.eq.s32.totalorder %s300, 0
    %s303 = sadd.s32 %s302, 1
    %s304 = scalar_select %p301, %s302, %s303
    %p307 = pneg %p301
    %p308 = scmp.eq.s32.totalorder %s20, 3
    %p309 = por %p307, %p308
    %p310 = scmp.ne.s32.totalorder %s302, %s305
    %p311 = scmp.eq.s32.totalorder %s20, 0
    %p312 = por %p310, %p311
    %p313 = scmp.ne.s32.totalorder %s302, %s305
    %p314 = scmp.eq.s32.totalorder %s25, 3
    %p315 = por %p313, %p314
    %p316 = scmp.ne.s32.totalorder %s305, %s306
    %p317 = scmp.eq.s32.totalorder %s25, 0
    %p318 = por %p316, %p317
    %p319 = scmp.ne.s32.totalorder %s305, %s306
    %p320 = scmp.eq.s32.totalorder %s26, 3
    %p321 = por %p319, %p320
    %p323 = scmp.ne.s32.totalorder %s306, %s322
    %p324 = scmp.eq.s32.totalorder %s26, 0
    %p325 = por %p323, %p324
    %s326 = ssub.s32 %s28, %s35
    %p327 = scmp.eq.s32.totalorder %s326, 0
    %s329 = sadd.s32 %s328, 1
    %s330 = scalar_select %p327, %s328, %s329
    %p333 = pneg %p327
    %p334 = scmp.eq.s32.totalorder %s20, 3
    %p335 = por %p333, %p334
    %p336 = scmp.ne.s32.totalorder %s328, %s331
    %p337 = scmp.eq.s32.totalorder %s20, 0
    %p338 = por %p336, %p337
    %p339 = scmp.ne.s32.totalorder %s328, %s331
    %p340 = scmp.eq.s32.totalorder %s25, 3
    %p341 = por %p339, %p340
    %p342 = scmp.ne.s32.totalorder %s331, %s332
    %p343 = scmp.eq.s32.totalorder %s25, 0
    %p344 = por %p342, %p343
    %p345 = scmp.ne.s32.totalorder %s331, %s332
    %p346 = scmp.eq.s32.totalorder %s26, 3
    %p347 = por %p345, %p346
    %p349 = scmp.ne.s32.totalorder %s332, %s348
    %p350 = scmp.eq.s32.totalorder %s26, 0
    %p351 = por %p349, %p350
    %s352 = ssub.s32 %s28, %s35
    %p353 = scmp.eq.s32.totalorder %s352, 0
    %s355 = sadd.s32 %s354, 1
    %s356 = scalar_select %p353, %s354, %s355
    %p359 = pneg %p353
    %p360 = scmp.eq.s32.totalorder %s20, 3
    %p361 = por %p359, %p360
    %p362 = scmp.ne.s32.totalorder %s354, %s357
    %p363 = scmp.eq.s32.totalorder %s20, 0
    %p364 = por %p362, %p363
    %p365 = scmp.ne.s32.totalorder %s354, %s357
    %p366 = scmp.eq.s32.totalorder %s25, 3
    %p367 = por %p365, %p366
    %p368 = scmp.ne.s32.totalorder %s357, %s358
    %p369 = scmp.eq.s32.totalorder %s25, 0
    %p370 = por %p368, %p369
    %p371 = scmp.ne.s32.totalorder %s357, %s358
    %p372 = scmp.eq.s32.totalorder %s26, 3
    %p373 = por %p371, %p372
    %p375 = scmp.ne.s32.totalorder %s358, %s374
    %p376 = scmp.eq.s32.totalorder %s26, 0
    %p377 = por %p375, %p376
    %s378 = ssub.s32 %s28, %s35
    %p379 = scmp.eq.s32.totalorder %s378, 0
    %s381 = sadd.s32 %s380, 1
    %s382 = scalar_select %p379, %s380, %s381
    %p385 = pneg %p379
    %p386 = scmp.eq.s32.totalorder %s20, 3
    %p387 = por %p385, %p386
    %p388 = scmp.ne.s32.totalorder %s380, %s383
    %p389 = scmp.eq.s32.totalorder %s20, 0
    %p390 = por %p388, %p389
    %p391 = scmp.ne.s32.totalorder %s380, %s383
    %p392 = scmp.eq.s32.totalorder %s25, 3
    %p393 = por %p391, %p392
    %p394 = scmp.ne.s32.totalorder %s383, %s384
    %p395 = scmp.eq.s32.totalorder %s25, 0
    %p396 = por %p394, %p395
    %p397 = scmp.ne.s32.totalorder %s383, %s384
    %p398 = scmp.eq.s32.totalorder %s26, 3
    %p399 = por %p397, %p398
    %p401 = scmp.ne.s32.totalorder %s384, %s400
    %p402 = scmp.eq.s32.totalorder %s26, 0
    %p403 = por %p401, %p402
    %s404 = ssub.s32 %s27, %s39
    %p405 = scmp.eq.s32.totalorder %s404, 0
    %s407 = sadd.s32 %s406, 1
    %s408 = scalar_select %p405, %s406, %s407
    %p411 = pneg %p405
    %p412 = scmp.eq.s32.totalorder %s20, 3
    %p413 = por %p411, %p412
    %p414 = scmp.ne.s32.totalorder %s406, %s409
    %p415 = scmp.eq.s32.totalorder %s20, 0
    %p416 = por %p414, %p415
    %p417 = scmp.ne.s32.totalorder %s406, %s409
    %p418 = scmp.eq.s32.totalorder %s25, 3
    %p419 = por %p417, %p418
    %p420 = scmp.ne.s32.totalorder %s409, %s410
    %p421 = scmp.eq.s32.totalorder %s25, 0
    %p422 = por %p420, %p421
    %p423 = scmp.ne.s32.totalorder %s409, %s410
    %p424 = scmp.eq.s32.totalorder %s26, 3
    %p425 = por %p423, %p424
    %p427 = scmp.ne.s32.totalorder %s410, %s426
    %p428 = scmp.eq.s32.totalorder %s26, 0
    %p429 = por %p427, %p428
    %p430 = scmp.le.s32.totalorder 1, %s20
    %p431 = scmp.lt.s32.totalorder %s20, 5
    %p432 = pnand %p430, %p431
    %p433 = pneg %p432
    // Predicated region
    $region9: #{lm_forward.2} parent=5 // pred_check
      _
    $region10: #{lm_forward.2} parent=5 // pred_check_branch
      %435 = sbr.rel (%p432) target = $region12
    $region11: #{lm_forward.2} parent=5 // pred_region
      %s436 = ssub.s32 %s20, 1
    $region12: #{lm_forward.2} parent=5 // pred_fallthru
      _
    %p437 = scmp.lt.s32.totalorder %s20, 4
    // Predicated region
    $region13: #{lm_forward.2} parent=5 // pred_check
      %p438 = pneg %p437
    $region14: #{lm_forward.2} parent=5 // pred_check_branch
      %440 = sbr.rel (%p438) target = $region16
    $region15: #{lm_forward.2} parent=5 // pred_region
      // Predicated region
      $region17: #{lm_forward.2} parent=15 // pred_check
        %p441 = pneg %p52
      $region18: #{lm_forward.2} parent=15 // pred_check_branch
        %443 = sbr.rel (%p441) target = $region20
      $region19: #{lm_forward.2} parent=15 // pred_region
        %s444 = smul.u32 2, %s27
        %p445 = scmp.lt.s32.totalorder %s444, 3
        %s446 = scalar_select %p445, %s444, 3
        %s447 = scalar_lea.vmem %s0, %s446
        %s448 = smul.u32 2, %s27
      $region20: #{lm_forward.2} parent=15 // pred_fallthru
        _
      // Predicated region
      $region21: #{lm_forward.2} parent=15 // pred_check
        %p449 = pneg %p78
      $region22: #{lm_forward.2} parent=15 // pred_check_branch
        %451 = sbr.rel (%p449) target = $region24
      $region23: #{lm_forward.2} parent=15 // pred_region
        %s452 = smul.u32 2, %s27
        %p453 = scmp.lt.s32.totalorder %s452, 3
        %s454 = scalar_select %p453, %s452, 3
        %s455 = smul.addr %s454, 4
        %s456 = scalar_lea.vmem %s1, %s455
        %s457 = smul.u32 2, %s27
      $region24: #{lm_forward.2} parent=15 // pred_fallthru
        _
      // Predicated region
      $region25: #{lm_forward.2} parent=15 // pred_check
        %p458 = pneg %p104
      $region26: #{lm_forward.2} parent=15 // pred_check_branch
        %460 = sbr.rel (%p458) target = $region28
      $region27: #{lm_forward.2} parent=15 // pred_region
        %p461 = scmp.lt.s32.totalorder %s28, 1
        %s462 = scalar_select %p461, %s28, 1
        %s463 = smul.addr %s462, 4
        %s464 = smul.addr %s463, 4
        %s465 = scalar_lea.vmem %s2, %s464
      $region28: #{lm_forward.2} parent=15 // pred_fallthru
        _
      // Predicated region
      $region29: #{lm_forward.2} parent=15 // pred_check
        %p466 = pneg %p130
      $region30: #{lm_forward.2} parent=15 // pred_check_branch
        %468 = sbr.rel (%p466) target = $region32
      $region31: #{lm_forward.2} parent=15 // pred_region
        %p469 = scmp.lt.s32.totalorder %s28, 1
        %s470 = scalar_select %p469, %s28, 1
        %s471 = scalar_lea.vmem %s3, %s470
      $region32: #{lm_forward.2} parent=15 // pred_fallthru
        _
      // Predicated region
      $region33: #{lm_forward.2} parent=15 // pred_check
        %p472 = pneg %p156
      $region34: #{lm_forward.2} parent=15 // pred_check_branch
        %474 = sbr.rel (%p472) target = $region36
      $region35: #{lm_forward.2} parent=15 // pred_region
        %p475 = scmp.lt.s32.totalorder %s28, 1
        %s476 = scalar_select %p475, %s28, 1
        %s477 = smul.addr %s476, 4
        %s478 = smul.addr %s477, 4
        %s479 = scalar_lea.vmem %s4, %s478
      $region36: #{lm_forward.2} parent=15 // pred_fallthru
        _
      // Predicated region
      $region37: #{lm_forward.2} parent=15 // pred_check
        %p480 = pneg %p182
      $region38: #{lm_forward.2} parent=15 // pred_check_branch
        %482 = sbr.rel (%p480) target = $region40
      $region39: #{lm_forward.2} parent=15 // pred_region
        %p483 = scmp.lt.s32.totalorder %s28, 1
        %s484 = scalar_select %p483, %s28, 1
        %s485 = scalar_lea.vmem %s5, %s484
      $region40: #{lm_forward.2} parent=15 // pred_fallthru
        _
      // Predicated region
      $region41: #{lm_forward.2} parent=15 // pred_check
        %p486 = pneg %p208
      $region42: #{lm_forward.2} parent=15 // pred_check_branch
        %488 = sbr.rel (%p486) target = $region44
      $region43: #{lm_forward.2} parent=15 // pred_region
        %p489 = scmp.lt.s32.totalorder %s28, 1
        %s490 = scalar_select %p489, %s28, 1
        %s491 = scalar_lea.vmem %s6, %s490
      $region44: #{lm_forward.2} parent=15 // pred_fallthru
        _
      // Predicated region
      $region45: #{lm_forward.2} parent=15 // pred_check
        %p492 = pneg %p234
      $region46: #{lm_forward.2} parent=15 // pred_check_branch
        %494 = sbr.rel (%p492) target = $region48
      $region47: #{lm_forward.2} parent=15 // pred_region
        %p495 = scmp.lt.s32.totalorder %s28, 1
        %s496 = scalar_select %p495, %s28, 1
        %s497 = scalar_lea.vmem %s7, %s496
      $region48: #{lm_forward.2} parent=15 // pred_fallthru
        _
      // Predicated region
      $region49: #{lm_forward.2} parent=15 // pred_check
        %p498 = pneg %p260
      $region50: #{lm_forward.2} parent=15 // pred_check_branch
        %500 = sbr.rel (%p498) target = $region52
      $region51: #{lm_forward.2} parent=15 // pred_region
        %p501 = scmp.lt.s32.totalorder %s28, 1
        %s502 = scalar_select %p501, %s28, 1
        %s503 = smul.addr %s502, 4
        %s504 = smul.addr %s503, 4
        %s505 = scalar_lea.vmem %s8, %s504
      $region52: #{lm_forward.2} parent=15 // pred_fallthru
        _
      // Predicated region
      $region53: #{lm_forward.2} parent=15 // pred_check
        %p506 = pneg %p286
      $region54: #{lm_forward.2} parent=15 // pred_check_branch
        %508 = sbr.rel (%p506) target = $region56
      $region55: #{lm_forward.2} parent=15 // pred_region
        %p509 = scmp.lt.s32.totalorder %s28, 1
        %s510 = scalar_select %p509, %s28, 1
        %s511 = scalar_lea.vmem %s9, %s510
      $region56: #{lm_forward.2} parent=15 // pred_fallthru
        _
      // Predicated region
      $region57: #{lm_forward.2} parent=15 // pred_check
        %p512 = pneg %p312
      $region58: #{lm_forward.2} parent=15 // pred_check_branch
        %514 = sbr.rel (%p512) target = $region60
      $region59: #{lm_forward.2} parent=15 // pred_region
        %p515 = scmp.lt.s32.totalorder %s28, 1
        %s516 = scalar_select %p515, %s28, 1
        %s517 = smul.addr %s516, 8
        %s518 = smul.addr %s517, 4
        %s519 = scalar_lea.vmem %s10, %s518
      $region60: #{lm_forward.2} parent=15 // pred_fallthru
        _
      // Predicated region
      $region61: #{lm_forward.2} parent=15 // pred_check
        %p520 = pneg %p338
      $region62: #{lm_forward.2} parent=15 // pred_check_branch
        %522 = sbr.rel (%p520) target = $region64
      $region63: #{lm_forward.2} parent=15 // pred_region
        %p523 = scmp.lt.s32.totalorder %s28, 1
        %s524 = scalar_select %p523, %s28, 1
        %s525 = scalar_lea.vmem %s11, %s524
      $region64: #{lm_forward.2} parent=15 // pred_fallthru
        _
      // Predicated region
      $region65: #{lm_forward.2} parent=15 // pred_check
        %p526 = pneg %p364
      $region66: #{lm_forward.2} parent=15 // pred_check_branch
        %528 = sbr.rel (%p526) target = $region68
      $region67: #{lm_forward.2} parent=15 // pred_region
        %p529 = scmp.lt.s32.totalorder %s28, 1
        %s530 = scalar_select %p529, %s28, 1
        %s531 = scalar_lea.vmem %s12, %s530
      $region68: #{lm_forward.2} parent=15 // pred_fallthru
        _
      // Predicated region
      $region69: #{lm_forward.2} parent=15 // pred_check
        %p532 = pneg %p390
      $region70: #{lm_forward.2} parent=15 // pred_check_branch
        %534 = sbr.rel (%p532) target = $region72
      $region71: #{lm_forward.2} parent=15 // pred_region
        %p535 = scmp.lt.s32.totalorder %s28, 1
        %s536 = scalar_select %p535, %s28, 1
        %s537 = scalar_lea.vmem %s13, %s536
      $region72: #{lm_forward.2} parent=15 // pred_fallthru
        _
    $region16: #{lm_forward.2} parent=5 // pred_fallthru
      _
    %p538 = scmp.le.s32.totalorder 1, %s20
    %p539 = scmp.lt.s32.totalorder %s20, 5
    %p540 = pnand %p538, %p539
    %p541 = pneg %p540
    // Predicated region
    $region73: #{lm_forward.2} parent=5 // pred_check
      _
    $region74: #{lm_forward.2} parent=5 // pred_check_branch
      %543 = sbr.rel (%p540) target = $region76
    $region75: #{lm_forward.2} parent=5 // pred_region
      %s544 = ssub.s32 %s20, 1
      %s545 = smul.u32 2, %s29
      %p546 = scmp.lt.s32.totalorder %s545, 3
      %s547 = scalar_select %p546, %s545, 3
      %s548 = scalar_lea.vmem %s0, %s547
      %p549 = pneg %p58
      %p550 = pneg %p55
      %s551 = smul.u32 2, %s29
      %p552 = scmp.lt.s32.totalorder %s551, 3
      %s553 = scalar_select %p552, %s551, 3
      %s554 = smul.addr %s553, 4
      %s555 = scalar_lea.vmem %s1, %s554
      %p556 = pneg %p84
      %p557 = pneg %p81
      %p558 = scmp.lt.s32.totalorder %s30, 1
      %s559 = scalar_select %p558, %s30, 1
      %s560 = smul.addr %s559, 4
      %s561 = smul.addr %s560, 4
      %s562 = scalar_lea.vmem %s2, %s561
      %p563 = pneg %p110
      %p564 = pneg %p107
      %p565 = scmp.lt.s32.totalorder %s30, 1
      %s566 = scalar_select %p565, %s30, 1
      %s567 = scalar_lea.vmem %s3, %s566
      %p568 = pneg %p136
      %p569 = pneg %p133
      %p570 = scmp.lt.s32.totalorder %s30, 1
      %s571 = scalar_select %p570, %s30, 1
      %s572 = smul.addr %s571, 4
      %s573 = smul.addr %s572, 4
      %s574 = scalar_lea.vmem %s4, %s573
      %p575 = pneg %p162
      %p576 = pneg %p159
      %p577 = scmp.lt.s32.totalorder %s30, 1
      %s578 = scalar_select %p577, %s30, 1
      %s579 = scalar_lea.vmem %s5, %s578
      %p580 = pneg %p188
      %p581 = pneg %p185
      %p582 = scmp.lt.s32.totalorder %s30, 1
      %s583 = scalar_select %p582, %s30, 1
      %s584 = scalar_lea.vmem %s6, %s583
      %p585 = pneg %p214
      %p586 = pneg %p211
      %p587 = scmp.lt.s32.totalorder %s30, 1
      %s588 = scalar_select %p587, %s30, 1
      %s589 = scalar_lea.vmem %s7, %s588
      %p590 = pneg %p240
      %p591 = pneg %p237
      %p592 = scmp.lt.s32.totalorder %s30, 1
      %s593 = scalar_select %p592, %s30, 1
      %s594 = smul.addr %s593, 4
      %s595 = smul.addr %s594, 4
      %s596 = scalar_lea.vmem %s8, %s595
      %p597 = pneg %p266
      %p598 = pneg %p263
      %p599 = scmp.lt.s32.totalorder %s30, 1
      %s600 = scalar_select %p599, %s30, 1
      %s601 = scalar_lea.vmem %s9, %s600
      %p602 = pneg %p292
      %p603 = pneg %p289
      %p604 = scmp.lt.s32.totalorder %s30, 1
      %s605 = scalar_select %p604, %s30, 1
      %s606 = smul.addr %s605, 8
      %s607 = smul.addr %s606, 4
      %s608 = scalar_lea.vmem %s10, %s607
      %p609 = pneg %p318
      %p610 = pneg %p315
      %p611 = scmp.lt.s32.totalorder %s30, 1
      %s612 = scalar_select %p611, %s30, 1
      %s613 = scalar_lea.vmem %s11, %s612
      %p614 = pneg %p344
      %p615 = pneg %p341
      %p616 = scmp.lt.s32.totalorder %s30, 1
      %s617 = scalar_select %p616, %s30, 1
      %s618 = scalar_lea.vmem %s12, %s617
      %p619 = pneg %p370
      %p620 = pneg %p367
      %p621 = scmp.lt.s32.totalorder %s30, 1
      %s622 = scalar_select %p621, %s30, 1
      %s623 = scalar_lea.vmem %s13, %s622
      %p624 = pneg %p396
      %p625 = pneg %p393
      %p626 = pneg %p422
      %p627 = pneg %p419
      %s628 = smul.u32 2, %s29
      %p629 = scmp.lt.s32.totalorder %s628, 3
      %s630 = scalar_select %p629, %s628, 3
      %s631 = smul.addr %s630, 4
      %s632 = scalar_lea.vmem %s14, %s631
      %s633 = smul.u32 2, %s29
      %p634 = scmp.lt.s32.totalorder %s633, 3
      %s635 = scalar_select %p634, %s633, 3
      %s636 = scalar_lea.vmem %s0, %s635
      %s637 = smul.u32 2, %s29
      %s638 = smul.u32 2, %s29
      %p639 = scmp.lt.s32.totalorder %s638, 3
      %s640 = scalar_select %p639, %s638, 3
      %s641 = smul.addr %s640, 4
      %s642 = scalar_lea.vmem %s1, %s641
      %s643 = smul.u32 2, %s29
      %p644 = scmp.lt.s32.totalorder %s30, 1
      %s645 = scalar_select %p644, %s30, 1
      %s646 = smul.addr %s645, 4
      %s647 = smul.addr %s646, 4
      %s648 = scalar_lea.vmem %s2, %s647
      %p649 = scmp.lt.s32.totalorder %s30, 1
      %s650 = scalar_select %p649, %s30, 1
      %s651 = scalar_lea.vmem %s3, %s650
      %p652 = scmp.lt.s32.totalorder %s30, 1
      %s653 = scalar_select %p652, %s30, 1
      %s654 = smul.addr %s653, 4
      %s655 = smul.addr %s654, 4
      %s656 = scalar_lea.vmem %s4, %s655
      %p657 = scmp.lt.s32.totalorder %s30, 1
      %s658 = scalar_select %p657, %s30, 1
      %s659 = scalar_lea.vmem %s5, %s658
      %p660 = scmp.lt.s32.totalorder %s30, 1
      %s661 = scalar_select %p660, %s30, 1
      %s662 = scalar_lea.vmem %s6, %s661
      %p663 = scmp.lt.s32.totalorder %s30, 1
      %s664 = scalar_select %p663, %s30, 1
      %s665 = scalar_lea.vmem %s7, %s664
      %p666 = scmp.lt.s32.totalorder %s30, 1
      %s667 = scalar_select %p666, %s30, 1
      %s668 = smul.addr %s667, 4
      %s669 = smul.addr %s668, 4
      %s670 = scalar_lea.vmem %s8, %s669
      %p671 = scmp.lt.s32.totalorder %s30, 1
      %s672 = scalar_select %p671, %s30, 1
      %s673 = scalar_lea.vmem %s9, %s672
      %p674 = scmp.lt.s32.totalorder %s30, 1
      %s675 = scalar_select %p674, %s30, 1
      %s676 = smul.addr %s675, 8
      %s677 = smul.addr %s676, 4
      %s678 = scalar_lea.vmem %s10, %s677
      %p679 = scmp.lt.s32.totalorder %s30, 1
      %s680 = scalar_select %p679, %s30, 1
      %s681 = scalar_lea.vmem %s11, %s680
      %p682 = scmp.lt.s32.totalorder %s30, 1
      %s683 = scalar_select %p682, %s30, 1
      %s684 = scalar_lea.vmem %s12, %s683
      %p685 = scmp.lt.s32.totalorder %s30, 1
      %s686 = scalar_select %p685, %s30, 1
      %s687 = scalar_lea.vmem %s13, %s686
      %s688 = smul.u32 2, %s29
      %p689 = scmp.lt.s32.totalorder %s688, 3
      %s690 = scalar_select %p689, %s688, 3
      %s691 = smul.addr %s690, 4
      %s692 = scalar_lea.vmem %s14, %s691
      %s693 = smul.u32 2, %s29
      %p695 = scmp.eq.s32.totalorder %s30, 0
      // Predicated region
      $region77: #{lm_forward.2} parent=75 // pred_check
        %p696 = pneg %p695
      $region78: #{lm_forward.2} parent=75 // pred_check_branch
        %698 = sbr.rel (%p696) target = $region80
      $region79: #{lm_forward.2} parent=75 // pred_region
        %v699 = vlaneseq
        %v700 = vshrl.u32 %v699, 7
        %v701 = vlaneseq
        %v702 = vand.u32 %v701, 127
        %vm703 = vcmp.le.s32.totalorder %v702, %v700
        %v704 = vld [vmem:[%s642] sm:$0xf]
        %v705 = vunpack.c.l.bf16 %v704
        %vm706 = vcmask 261120
        %707 = vst.msk [vmem:[#allocation2] sm:$0xff] %vm706, %v705
        %v708 = vld [vmem:[%s636] sm:$0x1]
        %vm709 = vcmp.ne.s32.totalorder %v708, 0
        %v710 = vsel %vm709, 1, 0
        %v711 = vlaneseq
        %v712 = vshrl.u32 %v711, 7
        %v713 = vsub.s32 0, %v712
        %v714 = vrot.slane %v710, %v713
        %vm715 = vcmp.eq.s32.totalorder %v714, 1
        %vm716 = vmand %vm703, %vm715
        %v717 = vsel %vm716, 0.0, -1e+09
        %vm718 = vcmask 64512
        %719 = vst.msk [vmem:[#allocation3] sm:$0xff] %vm718, %v717
        %s720 = scalar_lea.vmem %s642, 4
        %v721 = vld [vmem:[%s720] sm:$0xf]
        %v722 = vunpack.c.l.bf16 %v721
        %723 = vst.msk [vmem:[#allocation2 + $0x8] sm:$0xff] %vm706, %v722
        %s724 = scalar_lea.vmem %s636, 1
        %v725 = vld [vmem:[%s724] sm:$0x1]
        %vm726 = vcmp.ne.s32.totalorder %v725, 0
        %v727 = vsel %vm726, 1, 0
        %v728 = vlaneseq
        %v729 = vshrl.u32 %v728, 7
        %v730 = vsub.s32 0, %v729
        %v731 = vrot.slane %v727, %v730
        %vm732 = vcmp.eq.s32.totalorder %v731, 1
        %vm733 = vmand %vm703, %vm732
        %v734 = vsel %vm733, 0.0, -1e+09
        %s735 = scalar_lea.vmem [#allocation3], 8
        %736 = vst.msk [vmem:[%s735] sm:$0xff] %vm718, %v734
      $region80: #{lm_forward.2} parent=75 // pred_fallthru
        _
      %v737 = vld [vmem:[#allocation2] sm:$0xff]
      %v738 = vld [vmem:[#allocation2 + $0x8] sm:$0xff]
      %v739 = vpack.c.bf16 %v738, %v737
      %v740 = vld [vmem:[%s648] sm:$0xf]
      %v741 = vld [vmem:[%s648 + $0x4] sm:$0xf]
      %v742 = vld [vmem:[%s648 + $0x8] sm:$0xf]
      %v743 = vld [vmem:[%s648 + $0xc] sm:$0xf]
      %v744 = vld [vmem:[%s651] sm:$0x1]
      %v746 = vlaneseq
      %v747 = vshrl.u32 %v746, 7
      %v748 = vsub.s32 0, %v747
      %v749 = vrot.slane %v744, %v748
      %v755 = vunpack.c.l.b16 %v740
      %v756 = vunpack.c.l.b16 %v741
      %v757 = vunpack.c.l.b16 %v742
      %v758 = vunpack.c.l.b16 %v743
      %v759 = vpack.c.b16 %v756, %v755
      %v760 = vpack.c.b16 %v758, %v757
      %vm763 = vcmask 261120
      %v765 = vsel %vm763, %v739, 0
      %767 = vmatprep.subr.bf16.mxu0 0
      %768 = vmatpush1.bf16.msra.mxu0 %v759
      %769 = vmatprep.subr.bf16.mxu0 0
      %770 = vmatpush1.bf16.msra.mxu0 %v760
      %771 = vmatprep.subr.bf16.mxu0 0
      %772 = vmatpush1.bf16.msra.mxu0 0
      %773 = vmatprep.subr.bf16.mxu0 0
      %774 = vmatpush1.bf16.msra.mxu0 0
      %775 = vmatprep.subr.bf16.mxu0 0
      %776 = vmatpush1.bf16.msra.mxu0 0
      %777 = vmatprep.subr.bf16.mxu0 0
      %778 = vmatpush1.bf16.msra.mxu0 0
      %779 = vmatprep.subr.bf16.mxu0 0
      %780 = vmatpush1.bf16.msra.mxu0 0
      %781 = vmatprep.subr.bf16.mxu0 0
      %782 = vmatpush1.bf16.msra.mxu0 0
      %783 = vmatprep.subr.bf16.mxu0 0
      %784 = vmatpush1.bf16.msra.mxu0 0
      %785 = vmatprep.subr.bf16.mxu0 0
      %786 = vmatpush1.bf16.msra.mxu0 0
      %787 = vmatprep.subr.bf16.mxu0 0
      %788 = vmatpush1.bf16.msra.mxu0 0
      %789 = vmatprep.subr.bf16.mxu0 0
      %790 = vmatpush1.bf16.msra.mxu0 0
      %791 = vmatprep.subr.bf16.mxu0 0
      %792 = vmatpush1.bf16.msra.mxu0 0
      %793 = vmatprep.subr.bf16.mxu0 0
      %794 = vmatpush1.bf16.msra.mxu0 0
      %795 = vmatprep.subr.bf16.mxu0 0
      %796 = vmatpush1.bf16.msra.mxu0 0
      %797 = vmatprep.subr.bf16.mxu0 0
      %798 = vmatpush1.bf16.msra.mxu0 0
      %799 = vmatprep.mubr.bf16.mxu0 0
      %800 = vmatmul.mubr.bf16.gmra.mrb[0].mxu0 %v765
      %v801 = vpop.f32.mrb[0].mxu0
      %v802 = vadd.f32 %v749, %v801
      %v803 = vpop.f32.mrb[0].mxu0
      %v804 = vpop.f32.mrb[0].mxu0
      %v805 = vadd.f32 %v749, %v804
      %v806 = vpop.f32.mrb[0].mxu0
      %807 = vdwg.mxu0
      %v808 = vmul.f32 %v802, 0.35355338
      %v809 = vmul.f32 %v805, 0.35355338
      %812 = vrot.lane.b32.xlu0 %v808, 120
      %v813 = vpop.permute.xlu0 %812
      %814 = vrot.lane.b32.xlu0 %v809, 120
      %v815 = vpop.permute.xlu0 %814
      %818 = vrot.lane.b32.xlu0 %v808, 112
      %v819 = vpop.permute.xlu0 %818
      %820 = vrot.lane.b32.xlu0 %v809, 112
      %v821 = vpop.permute.xlu0 %820
      %824 = vrot.lane.b32.xlu0 %v808, 104
      %v825 = vpop.permute.xlu0 %824
      %826 = vrot.lane.b32.xlu0 %v809, 104
      %v827 = vpop.permute.xlu0 %826
      %v830 = vpack.c.bf16 %v809, %v808
      %v831 = vpack.c.bf16 %v815, %v813
      %v832 = vpack.c.bf16 %v821, %v819
      %v833 = vpack.c.bf16 %v827, %v825
      %836 = vrot.lane.b32.xlu0 %v802, 120
      %v837 = vpop.permute.xlu0 %836
      %838 = vrot.lane.b32.xlu0 %v805, 120
      %v839 = vpop.permute.xlu0 %838
      %842 = vrot.lane.b32.xlu0 %v802, 112
      %v843 = vpop.permute.xlu0 %842
      %844 = vrot.lane.b32.xlu0 %v805, 112
      %v845 = vpop.permute.xlu0 %844
      %848 = vrot.lane.b32.xlu0 %v802, 104
      %v849 = vpop.permute.xlu0 %848
      %850 = vrot.lane.b32.xlu0 %v805, 104
      %v851 = vpop.permute.xlu0 %850
      %v854 = vpack.c.bf16 %v805, %v802
      %v855 = vpack.c.bf16 %v839, %v837
      %v856 = vpack.c.bf16 %v845, %v843
      %v857 = vpack.c.bf16 %v851, %v849
      %v858 = vld [vmem:[#allocation3] sm:$0xff]
      %860 = vrot.lane.b32.xlu0 %v854, 96
      %v861 = vpop.permute.xlu0 %860
      %vm862 = vcmask 64512
      %v864 = vsel %vm862, %v830, 0
      %v867 = vsel %vm862, %v861, 0
      %869 = vmatprep.subr.bf16.mxu0 0
      %870 = vmatpush1.bf16.xpose.msra.mxu0 %v867
      %871 = vmatprep.subr.bf16.mxu0 0
      %872 = vmatpush1.bf16.xpose.msra.mxu0 0
      %873 = vmatprep.subr.bf16.mxu0 0
      %874 = vmatpush1.bf16.xpose.msra.mxu0 0
      %875 = vmatprep.subr.bf16.mxu0 0
      %876 = vmatpush1.bf16.xpose.msra.mxu0 0
      %877 = vmatprep.subr.bf16.mxu0 0
      %878 = vmatpush1.bf16.xpose.msra.mxu0 0
      %879 = vmatprep.subr.bf16.mxu0 0
      %880 = vmatpush1.bf16.xpose.msra.mxu0 0
      %881 = vmatprep.subr.bf16.mxu0 0
      %882 = vmatpush1.bf16.xpose.msra.mxu0 0
      %883 = vmatprep.subr.bf16.mxu0 0
      %884 = vmatpush1.bf16.xpose.msra.mxu0 0
      %885 = vmatprep.subr.bf16.mxu0 0
      %886 = vmatpush1.bf16.xpose.msra.mxu0 0
      %887 = vmatprep.subr.bf16.mxu0 0
      %888 = vmatpush1.bf16.xpose.msra.mxu0 0
      %889 = vmatprep.subr.bf16.mxu0 0
      %890 = vmatpush1.bf16.xpose.msra.mxu0 0
      %891 = vmatprep.subr.bf16.mxu0 0
      %892 = vmatpush1.bf16.xpose.msra.mxu0 0
      %893 = vmatprep.subr.bf16.mxu0 0
      %894 = vmatpush1.bf16.xpose.msra.mxu0 0
      %895 = vmatprep.subr.bf16.mxu0 0
      %896 = vmatpush1.bf16.xpose.msra.mxu0 0
      %897 = vmatprep.subr.bf16.mxu0 0
      %898 = vmatpush1.bf16.xpose.msra.mxu0 0
      %899 = vmatprep.subr.bf16.mxu0 0
      %900 = vmatpush1.bf16.xpose.msra.mxu0 0
      %901 = vmatprep.mubr.bf16.mxu0 0
      %902 = vmatmul.mubr.bf16.gmra.mrb[0].mxu0 %v864
      %v903 = vpop.f32.mrb[0].mxu0
      %v904 = vadd.f32 %v858, %v903
      %v905 = vpop.f32.mrb[0].mxu0
      %v906 = vpop.f32.mrb[0].mxu0
      %v907 = vpop.f32.mrb[0].mxu0
      %908 = vdwg.mxu0
      %910 = vrot.lane.b32.xlu0 %v855, 96
      %v911 = vpop.permute.xlu0 %910
      %v913 = vsel %vm862, %v831, 0
      %v916 = vsel %vm862, %v911, 0
      %918 = vmatprep.subr.bf16.mxu0 0
      %919 = vmatpush1.bf16.xpose.msra.mxu0 %v916
      %920 = vmatprep.subr.bf16.mxu0 0
      %921 = vmatpush1.bf16.xpose.msra.mxu0 0
      %922 = vmatprep.subr.bf16.mxu0 0
      %923 = vmatpush1.bf16.xpose.msra.mxu0 0
      %924 = vmatprep.subr.bf16.mxu0 0
      %925 = vmatpush1.bf16.xpose.msra.mxu0 0
      %926 = vmatprep.subr.bf16.mxu0 0
      %927 = vmatpush1.bf16.xpose.msra.mxu0 0
      %928 = vmatprep.subr.bf16.mxu0 0
      %929 = vmatpush1.bf16.xpose.msra.mxu0 0
      %930 = vmatprep.subr.bf16.mxu0 0
      %931 = vmatpush1.bf16.xpose.msra.mxu0 0
      %932 = vmatprep.subr.bf16.mxu0 0
      %933 = vmatpush1.bf16.xpose.msra.mxu0 0
      %934 = vmatprep.subr.bf16.mxu0 0
      %935 = vmatpush1.bf16.xpose.msra.mxu0 0
      %936 = vmatprep.subr.bf16.mxu0 0
      %937 = vmatpush1.bf16.xpose.msra.mxu0 0
      %938 = vmatprep.subr.bf16.mxu0 0
      %939 = vmatpush1.bf16.xpose.msra.mxu0 0
      %940 = vmatprep.subr.bf16.mxu0 0
      %941 = vmatpush1.bf16.xpose.msra.mxu0 0
      %942 = vmatprep.subr.bf16.mxu0 0
      %943 = vmatpush1.bf16.xpose.msra.mxu0 0
      %944 = vmatprep.subr.bf16.mxu0 0
      %945 = vmatpush1.bf16.xpose.msra.mxu0 0
      %946 = vmatprep.subr.bf16.mxu0 0
      %947 = vmatpush1.bf16.xpose.msra.mxu0 0
      %948 = vmatprep.subr.bf16.mxu0 0
      %949 = vmatpush1.bf16.xpose.msra.mxu0 0
      %950 = vmatprep.mubr.bf16.mxu0 0
      %951 = vmatmul.mubr.bf16.gmra.mrb[0].mxu0 %v913
      %v952 = vpop.f32.mrb[0].mxu0
      %v953 = vadd.f32 %v858, %v952
      %v954 = vpop.f32.mrb[0].mxu0
      %v955 = vpop.f32.mrb[0].mxu0
      %v956 = vpop.f32.mrb[0].mxu0
      %957 = vdwg.mxu0
      %959 = vrot.lane.b32.xlu0 %v856, 96
      %v960 = vpop.permute.xlu0 %959
      %v962 = vsel %vm862, %v832, 0
      %v965 = vsel %vm862, %v960, 0
      %967 = vmatprep.subr.bf16.mxu0 0
      %968 = vmatpush1.bf16.xpose.msra.mxu0 %v965
      %969 = vmatprep.subr.bf16.mxu0 0
      %970 = vmatpush1.bf16.xpose.msra.mxu0 0
      %971 = vmatprep.subr.bf16.mxu0 0
      %972 = vmatpush1.bf16.xpose.msra.mxu0 0
      %973 = vmatprep.subr.bf16.mxu0 0
      %974 = vmatpush1.bf16.xpose.msra.mxu0 0
      %975 = vmatprep.subr.bf16.mxu0 0
      %976 = vmatpush1.bf16.xpose.msra.mxu0 0
      %977 = vmatprep.subr.bf16.mxu0 0
      %978 = vmatpush1.bf16.xpose.msra.mxu0 0
      %979 = vmatprep.subr.bf16.mxu0 0
      %980 = vmatpush1.bf16.xpose.msra.mxu0 0
      %981 = vmatprep.subr.bf16.mxu0 0
      %982 = vmatpush1.bf16.xpose.msra.mxu0 0
      %983 = vmatprep.subr.bf16.mxu0 0
      %984 = vmatpush1.bf16.xpose.msra.mxu0 0
      %985 = vmatprep.subr.bf16.mxu0 0
      %986 = vmatpush1.bf16.xpose.msra.mxu0 0
      %987 = vmatprep.subr.bf16.mxu0 0
      %988 = vmatpush1.bf16.xpose.msra.mxu0 0
      %989 = vmatprep.subr.bf16.mxu0 0
      %990 = vmatpush1.bf16.xpose.msra.mxu0 0
      %991 = vmatprep.subr.bf16.mxu0 0
      %992 = vmatpush1.bf16.xpose.msra.mxu0 0
      %993 = vmatprep.subr.bf16.mxu0 0
      %994 = vmatpush1.bf16.xpose.msra.mxu0 0
      %995 = vmatprep.subr.bf16.mxu0 0
      %996 = vmatpush1.bf16.xpose.msra.mxu0 0
      %997 = vmatprep.subr.bf16.mxu0 0
      %998 = vmatpush1.bf16.xpose.msra.mxu0 0
      %999 = vmatprep.mubr.bf16.mxu0 0
      %1000 = vmatmul.mubr.bf16.gmra.mrb[0].mxu0 %v962
      %v1001 = vpop.f32.mrb[0].mxu0
      %v1002 = vadd.f32 %v858, %v1001
      %v1003 = vpop.f32.mrb[0].mxu0
      %v1004 = vpop.f32.mrb[0].mxu0
      %v1005 = vpop.f32.mrb[0].mxu0
      %1006 = vdwg.mxu0
      %1008 = vrot.lane.b32.xlu0 %v857, 96
      %v1009 = vpop.permute.xlu0 %1008
      %v1011 = vsel %vm862, %v833, 0
      %v1014 = vsel %vm862, %v1009, 0
      %1016 = vmatprep.subr.bf16.mxu0 0
      %1017 = vmatpush1.bf16.xpose.msra.mxu0 %v1014
      %1018 = vmatprep.subr.bf16.mxu0 0
      %1019 = vmatpush1.bf16.xpose.msra.mxu0 0
      %1020 = vmatprep.subr.bf16.mxu0 0
      %1021 = vmatpush1.bf16.xpose.msra.mxu0 0
      %1022 = vmatprep.subr.bf16.mxu0 0
      %1023 = vmatpush1.bf16.xpose.msra.mxu0 0
      %1024 = vmatprep.subr.bf16.mxu0 0
      %1025 = vmatpush1.bf16.xpose.msra.mxu0 0
      %1026 = vmatprep.subr.bf16.mxu0 0
      %1027 = vmatpush1.bf16.xpose.msra.mxu0 0
      %1028 = vmatprep.subr.bf16.mxu0 0
      %1029 = vmatpush1.bf16.xpose.msra.mxu0 0
      %1030 = vmatprep.subr.bf16.mxu0 0
      %1031 = vmatpush1.bf16.xpose.msra.mxu0 0
      %1032 = vmatprep.subr.bf16.mxu0 0
      %1033 = vmatpush1.bf16.xpose.msra.mxu0 0
      %1034 = vmatprep.subr.bf16.mxu0 0
      %1035 = vmatpush1.bf16.xpose.msra.mxu0 0
      %1036 = vmatprep.subr.bf16.mxu0 0
      %1037 = vmatpush1.bf16.xpose.msra.mxu0 0
      %1038 = vmatprep.subr.bf16.mxu0 0
      %1039 = vmatpush1.bf16.xpose.msra.mxu0 0
      %1040 = vmatprep.subr.bf16.mxu0 0
      %1041 = vmatpush1.bf16.xpose.msra.mxu0 0
      %1042 = vmatprep.subr.bf16.mxu0 0
      %1043 = vmatpush1.bf16.xpose.msra.mxu0 0
      %1044 = vmatprep.subr.bf16.mxu0 0
      %1045 = vmatpush1.bf16.xpose.msra.mxu0 0
      %1046 = vmatprep.subr.bf16.mxu0 0
      %1047 = vmatpush1.bf16.xpose.msra.mxu0 0
      %1048 = vmatprep.mubr.bf16.mxu0 0
      %1049 = vmatmul.mubr.bf16.gmra.mrb[0].mxu0 %v1011
      %v1050 = vpop.f32.mrb[0].mxu0
      %v1051 = vadd.f32 %v858, %v1050
      %v1052 = vpop.f32.mrb[0].mxu0
      %v1053 = vpop.f32.mrb[0].mxu0
      %v1054 = vpop.f32.mrb[0].mxu0
      %1055 = vdwg.mxu0
      %v1056 = vsel %vm862, %v904, -inf
      %1057 = vmax.xlane.f32.xlu0 %v1056
      %v1058 = vpop.xlane.xlu0 %1057
      %v1059 = vsel %vm862, %v953, -inf
      %1060 = vmax.xlane.f32.xlu0 %v1059
      %v1061 = vpop.xlane.xlu0 %1060
      %v1062 = vsel %vm862, %v1002, -inf
      %1063 = vmax.xlane.f32.xlu0 %v1062
      %v1064 = vpop.xlane.xlu0 %1063
      %v1065 = vsel %vm862, %v1051, -inf
      %1066 = vmax.xlane.f32.xlu0 %v1065
      %v1067 = vpop.xlane.xlu0 %1066
      %v1068 = vsub.f32 %v904, %v1058
      %v1069 = vsub.f32 %v953, %v1061
      %v1070 = vsub.f32 %v1002, %v1064
      %v1071 = vsub.f32 %v1051, %v1067
      %v1072 = vmul.f32 %v1068, 1.442695
      %v1073 = vpow.pop %v1072
      %v1074 = vmul.f32 %v1069, 1.442695
      %v1075 = vpow.pop %v1074
      %v1076 = vmul.f32 %v1070, 1.442695
      %v1077 = vpow.pop %v1076
      %v1078 = vmul.f32 %v1071, 1.442695
      %v1079 = vpow.pop %v1078
      %v1080 = vsel %vm862, %v1073, 0.0
      %1081 = vadd.xlane.f32.xlu0 %v1080
      %v1082 = vpop.xlane.xlu0 %1081
      %v1083 = vsel %vm862, %v1075, 0.0
      %1084 = vadd.xlane.f32.xlu0 %v1083
      %v1085 = vpop.xlane.xlu0 %1084
      %v1086 = vsel %vm862, %v1077, 0.0
      %1087 = vadd.xlane.f32.xlu0 %v1086
      %v1088 = vpop.xlane.xlu0 %1087
      %v1089 = vsel %vm862, %v1079, 0.0
      %1090 = vadd.xlane.f32.xlu0 %v1089
      %v1091 = vpop.xlane.xlu0 %1090
      %v1092 = vrcp.pop %v1082
      %v1093 = vrcp.pop %v1085
      %v1094 = vrcp.pop %v1088
      %v1095 = vrcp.pop %v1091
      %v1096 = vmul.f32 %v1073, %v1092
      %v1097 = vmul.f32 %v1075, %v1093
      %v1098 = vmul.f32 %v1077, %v1094
      %v1099 = vmul.f32 %v1079, %v1095
      %v1100 = vpack.c.bf16 %v1096, %v1096
      %v1101 = vpack.c.bf16 %v1097, %v1097
      %v1102 = vpack.c.bf16 %v1098, %v1098
      %v1103 = vpack.c.bf16 %v1099, %v1099
      %1104 = vrot.lane.b32.xlu0 %v854, 64
      %v1105 = vpop.permute.xlu0 %1104
      %v1107 = vsel %vm862, %v1100, 0
      %vm1109 = vcmask 1043456
      %v1111 = vsel %vm1109, %v1105, 0
      %1113 = vmatprep.subr.bf16.mxu0 0
      %1114 = vmatpush1.bf16.msra.mxu0 %v1111
      %1115 = vmatprep.subr.bf16.mxu0 0
      %1116 = vmatpush1.bf16.msra.mxu0 0
      %1117 = vmatprep.subr.bf16.mxu0 0
      %1118 = vmatpush1.bf16.msra.mxu0 0
      %1119 = vmatprep.subr.bf16.mxu0 0
      %1120 = vmatpush1.bf16.msra.mxu0 0
      %1121 = vmatprep.subr.bf16.mxu0 0
      %1122 = vmatpush1.bf16.msra.mxu0 0
      %1123 = vmatprep.subr.bf16.mxu0 0
      %1124 = vmatpush1.bf16.msra.mxu0 0
      %1125 = vmatprep.subr.bf16.mxu0 0
      %1126 = vmatpush1.bf16.msra.mxu0 0
      %1127 = vmatprep.subr.bf16.mxu0 0
      %1128 = vmatpush1.bf16.msra.mxu0 0
      %1129 = vmatprep.subr.bf16.mxu0 0
      %1130 = vmatpush1.bf16.msra.mxu0 0
      %1131 = vmatprep.subr.bf16.mxu0 0
      %1132 = vmatpush1.bf16.msra.mxu0 0
      %1133 = vmatprep.subr.bf16.mxu0 0
      %1134 = vmatpush1.bf16.msra.mxu0 0
      %1135 = vmatprep.subr.bf16.mxu0 0
      %1136 = vmatpush1.bf16.msra.mxu0 0
      %1137 = vmatprep.subr.bf16.mxu0 0
      %1138 = vmatpush1.bf16.msra.mxu0 0
      %1139 = vmatprep.subr.bf16.mxu0 0
      %1140 = vmatpush1.bf16.msra.mxu0 0
      %1141 = vmatprep.subr.bf16.mxu0 0
      %1142 = vmatpush1.bf16.msra.mxu0 0
      %1143 = vmatprep.subr.bf16.mxu0 0
      %1144 = vmatpush1.bf16.msra.mxu0 0
      %1145 = vmatprep.mubr.bf16.mxu0 0
      %1146 = vmatmul.mubr.bf16.gmra.mrb[0].mxu0 %v1107
      %v1147 = vpop.f32.mrb[0].mxu0
      %v1148 = vadd.f32 0.0, %v1147
      %v1149 = vpop.f32.mrb[0].mxu0
      %v1150 = vpop.f32.mrb[0].mxu0
      %v1151 = vpop.f32.mrb[0].mxu0
      %1152 = vdwg.mxu0
      %1153 = vrot.lane.b32.xlu0 %v855, 64
      %v1154 = vpop.permute.xlu0 %1153
      %v1156 = vsel %vm862, %v1101, 0
      %v1159 = vsel %vm1109, %v1154, 0
      %1161 = vmatprep.subr.bf16.mxu0 0
      %1162 = vmatpush1.bf16.msra.mxu0 %v1159
      %1163 = vmatprep.subr.bf16.mxu0 0
      %1164 = vmatpush1.bf16.msra.mxu0 0
      %1165 = vmatprep.subr.bf16.mxu0 0
      %1166 = vmatpush1.bf16.msra.mxu0 0
      %1167 = vmatprep.subr.bf16.mxu0 0
      %1168 = vmatpush1.bf16.msra.mxu0 0
      %1169 = vmatprep.subr.bf16.mxu0 0
      %1170 = vmatpush1.bf16.msra.mxu0 0
      %1171 = vmatprep.subr.bf16.mxu0 0
      %1172 = vmatpush1.bf16.msra.mxu0 0
      %1173 = vmatprep.subr.bf16.mxu0 0
      %1174 = vmatpush1.bf16.msra.mxu0 0
      %1175 = vmatprep.subr.bf16.mxu0 0
      %1176 = vmatpush1.bf16.msra.mxu0 0
      %1177 = vmatprep.subr.bf16.mxu0 0
      %1178 = vmatpush1.bf16.msra.mxu0 0
      %1179 = vmatprep.subr.bf16.mxu0 0
      %1180 = vmatpush1.bf16.msra.mxu0 0
      %1181 = vmatprep.subr.bf16.mxu0 0
      %1182 = vmatpush1.bf16.msra.mxu0 0
      %1183 = vmatprep.subr.bf16.mxu0 0
      %1184 = vmatpush1.bf16.msra.mxu0 0
      %1185 = vmatprep.subr.bf16.mxu0 0
      %1186 = vmatpush1.bf16.msra.mxu0 0
      %1187 = vmatprep.subr.bf16.mxu0 0
      %1188 = vmatpush1.bf16.msra.mxu0 0
      %1189 = vmatprep.subr.bf16.mxu0 0
      %1190 = vmatpush1.bf16.msra.mxu0 0
      %1191 = vmatprep.subr.bf16.mxu0 0
      %1192 = vmatpush1.bf16.msra.mxu0 0
      %1193 = vmatprep.mubr.bf16.mxu0 0
      %1194 = vmatmul.mubr.bf16.gmra.mrb[0].mxu0 %v1156
      %v1195 = vpop.f32.mrb[0].mxu0
      %v1196 = vadd.f32 0.0, %v1195
      %v1197 = vpop.f32.mrb[0].mxu0
      %v1198 = vpop.f32.mrb[0].mxu0
      %v1199 = vpop.f32.mrb[0].mxu0
      %1200 = vdwg.mxu0
      %1201 = vrot.lane.b32.xlu0 %v856, 64
      %v1202 = vpop.permute.xlu0 %1201
      %v1204 = vsel %vm862, %v1102, 0
      %v1207 = vsel %vm1109, %v1202, 0
      %1209 = vmatprep.subr.bf16.mxu0 0
      %1210 = vmatpush1.bf16.msra.mxu0 %v1207
      %1211 = vmatprep.subr.bf16.mxu0 0
      %1212 = vmatpush1.bf16.msra.mxu0 0
      %1213 = vmatprep.subr.bf16.mxu0 0
      %1214 = vmatpush1.bf16.msra.mxu0 0
      %1215 = vmatprep.subr.bf16.mxu0 0
      %1216 = vmatpush1.bf16.msra.mxu0 0
      %1217 = vmatprep.subr.bf16.mxu0 0
      %1218 = vmatpush1.bf16.msra.mxu0 0
      %1219 = vmatprep.subr.bf16.mxu0 0
      %1220 = vmatpush1.bf16.msra.mxu0 0
      %1221 = vmatprep.subr.bf16.mxu0 0
      %1222 = vmatpush1.bf16.msra.mxu0 0
      %1223 = vmatprep.subr.bf16.mxu0 0
      %1224 = vmatpush1.bf16.msra.mxu0 0
      %1225 = vmatprep.subr.bf16.mxu0 0
      %1226 = vmatpush1.bf16.msra.mxu0 0
      %1227 = vmatprep.subr.bf16.mxu0 0
      %1228 = vmatpush1.bf16.msra.mxu0 0
      %1229 = vmatprep.subr.bf16.mxu0 0
      %1230 = vmatpush1.bf16.msra.mxu0 0
      %1231 = vmatprep.subr.bf16.mxu0 0
      %1232 = vmatpush1.bf16.msra.mxu0 0
      %1233 = vmatprep.subr.bf16.mxu0 0
      %1234 = vmatpush1.bf16.msra.mxu0 0
      %1235 = vmatprep.subr.bf16.mxu0 0
      %1236 = vmatpush1.bf16.msra.mxu0 0
      %1237 = vmatprep.subr.bf16.mxu0 0
      %1238 = vmatpush1.bf16.msra.mxu0 0
      %1239 = vmatprep.subr.bf16.mxu0 0
      %1240 = vmatpush1.bf16.msra.mxu0 0
      %1241 = vmatprep.mubr.bf16.mxu0 0
      %1242 = vmatmul.mubr.bf16.gmra.mrb[0].mxu0 %v1204
      %v1243 = vpop.f32.mrb[0].mxu0
      %v1244 = vadd.f32 0.0, %v1243
      %v1245 = vpop.f32.mrb[0].mxu0
      %v1246 = vpop.f32.mrb[0].mxu0
      %v1247 = vpop.f32.mrb[0].mxu0
      %1248 = vdwg.mxu0
      %1249 = vrot.lane.b32.xlu0 %v857, 64
      %v1250 = vpop.permute.xlu0 %1249
      %v1252 = vsel %vm862, %v1103, 0
      %v1255 = vsel %vm1109, %v1250, 0
      %1257 = vmatprep.subr.bf16.mxu0 0
      %1258 = vmatpush1.bf16.msra.mxu0 %v1255
      %1259 = vmatprep.subr.bf16.mxu0 0
      %1260 = vmatpush1.bf16.msra.mxu0 0
      %1261 = vmatprep.subr.bf16.mxu0 0
      %1262 = vmatpush1.bf16.msra.mxu0 0
      %1263 = vmatprep.subr.bf16.mxu0 0
      %1264 = vmatpush1.bf16.msra.mxu0 0
      %1265 = vmatprep.subr.bf16.mxu0 0
      %1266 = vmatpush1.bf16.msra.mxu0 0
      %1267 = vmatprep.subr.bf16.mxu0 0
      %1268 = vmatpush1.bf16.msra.mxu0 0
      %1269 = vmatprep.subr.bf16.mxu0 0
      %1270 = vmatpush1.bf16.msra.mxu0 0
      %1271 = vmatprep.subr.bf16.mxu0 0
      %1272 = vmatpush1.bf16.msra.mxu0 0
      %1273 = vmatprep.subr.bf16.mxu0 0
      %1274 = vmatpush1.bf16.msra.mxu0 0
      %1275 = vmatprep.subr.bf16.mxu0 0
      %1276 = vmatpush1.bf16.msra.mxu0 0
      %1277 = vmatprep.subr.bf16.mxu0 0
      %1278 = vmatpush1.bf16.msra.mxu0 0
      %1279 = vmatprep.subr.bf16.mxu0 0
      %1280 = vmatpush1.bf16.msra.mxu0 0
      %1281 = vmatprep.subr.bf16.mxu0 0
      %1282 = vmatpush1.bf16.msra.mxu0 0
      %1283 = vmatprep.subr.bf16.mxu0 0
      %1284 = vmatpush1.bf16.msra.mxu0 0
      %1285 = vmatprep.subr.bf16.mxu0 0
      %1286 = vmatpush1.bf16.msra.mxu0 0
      %1287 = vmatprep.subr.bf16.mxu0 0
      %1288 = vmatpush1.bf16.msra.mxu0 0
      %1289 = vmatprep.mubr.bf16.mxu0 0
      %1290 = vmatmul.mubr.bf16.gmra.mrb[0].mxu0 %v1252
      %v1291 = vpop.f32.mrb[0].mxu0
      %v1292 = vadd.f32 0.0, %v1291
      %v1293 = vpop.f32.mrb[0].mxu0
      %v1294 = vpop.f32.mrb[0].mxu0
      %v1295 = vpop.f32.mrb[0].mxu0
      %1296 = vdwg.mxu0
      %1298 = vrot.lane.b32.xlu0 %v1196, 8
      %v1299 = vpop.permute.xlu0 %1298
      %1302 = vrot.lane.b32.xlu0 %v1244, 16
      %v1303 = vpop.permute.xlu0 %1302
      %1306 = vrot.lane.b32.xlu0 %v1292, 24
      %v1307 = vpop.permute.xlu0 %1306
      %v1309 = vsel %vm862, %v1148, %v1299
      %vm1310 = vcmask 130048
      %v1311 = vsel %vm1310, %v1309, %v1303
      %vm1312 = vcmask 195584
      %v1313 = vsel %vm1312, %v1311, %v1307
      %s1314 = scalar_lea.vmem [#allocation3], 8
      %v1315 = vld [vmem:[%s1314] sm:$0xff]
      %v1317 = vrot.slane %v830, 4
      %v1318 = vrot.slane %v854, 4
      %1319 = vrot.lane.b32.xlu0 %v1318, 96
      %v1320 = vpop.permute.xlu0 %1319
      %v1322 = vsel %vm862, %v1317, 0
      %v1325 = vsel %vm862, %v1320, 0
      %1327 = vmatprep.subr.bf16.mxu0 0
      %1328 = vmatpush1.bf16.xpose.msra.mxu0 %v1325
      %1329 = vmatprep.subr.bf16.mxu0 0
      %1330 = vmatpush1.bf16.xpose.msra.mxu0 0
      %1331 = vmatprep.subr.bf16.mxu0 0
      %1332 = vmatpush1.bf16.xpose.msra.mxu0 0
      %1333 = vmatprep.subr.bf16.mxu0 0
      %1334 = vmatpush1.bf16.xpose.msra.mxu0 0
      %1335 = vmatprep.subr.bf16.mxu0 0
      %1336 = vmatpush1.bf16.xpose.msra.mxu0 0
      %1337 = vmatprep.subr.bf16.mxu0 0
      %1338 = vmatpush1.bf16.xpose.msra.mxu0 0
      %1339 = vmatprep.subr.bf16.mxu0 0
      %1340 = vmatpush1.bf16.xpose.msra.mxu0 0
      %1341 = vmatprep.subr.bf16.mxu0 0
      %1342 = vmatpush1.bf16.xpose.msra.mxu0 0
      %1343 = vmatprep.subr.bf16.mxu0 0
      %1344 = vmatpush1.bf16.xpose.msra.mxu0 0
      %1345 = vmatprep.subr.bf16.mxu0 0
      %1346 = vmatpush1.bf16.xpose.msra.mxu0 0
      %1347 = vmatprep.subr.bf16.mxu0 0
      %1348 = vmatpush1.bf16.xpose.msra.mxu0 0
      %1349 = vmatprep.subr.bf16.mxu0 0
      %1350 = vmatpush1.bf16.xpose.msra.mxu0 0
      %1351 = vmatprep.subr.bf16.mxu0 0
      %1352 = vmatpush1.bf16.xpose.msra.mxu0 0
      %1353 = vmatprep.subr.bf16.mxu0 0
      %1354 = vmatpush1.bf16.xpose.msra.mxu0 0
      %1355 = vmatprep.subr.bf16.mxu0 0
      %1356 = vmatpush1.bf16.xpose.msra.mxu0 0
      %1357 = vmatprep.subr.bf16.mxu0 0
      %1358 = vmatpush1.bf16.xpose.msra.mxu0 0
      %1359 = vmatprep.mubr.bf16.mxu0 0
      %1360 = vmatmul.mubr.bf16.gmra.mrb[0].mxu0 %v1322
      %v1361 = vpop.f32.mrb[0].mxu0
      %v1362 = vadd.f32 %v1315, %v1361
      %v1363 = vpop.f32.mrb[0].mxu0
      %v1364 = vpop.f32.mrb[0].mxu0
      %v1365 = vpop.f32.mrb[0].mxu0
      %1366 = vdwg.mxu0
      %v1368 = vrot.slane %v831, 4
      %v1369 = vrot.slane %v855, 4
      %1370 = vrot.lane.b32.xlu0 %v1369, 96
      %v1371 = vpop.permute.xlu0 %1370
      %v1373 = vsel %vm862, %v1368, 0
      %v1376 = vsel %vm862, %v1371, 0
      %1378 = vmatprep.subr.bf16.mxu0 0
      %1379 = vmatpush1.bf16.xpose.msra.mxu0 %v1376
      %1380 = vmatprep.subr.bf16.mxu0 0
      %1381 = vmatpush1.bf16.xpose.msra.mxu0 0
      %1382 = vmatprep.subr.bf16.mxu0 0
      %1383 = vmatpush1.bf16.xpose.msra.mxu0 0
      %1384 = vmatprep.subr.bf16.mxu0 0
      %1385 = vmatpush1.bf16.xpose.msra.mxu0 0
      %1386 = vmatprep.subr.bf16.mxu0 0
      %1387 = vmatpush1.bf16.xpose.msra.mxu0 0
      %1388 = vmatprep.subr.bf16.mxu0 0
      %1389 = vmatpush1.bf16.xpose.msra.mxu0 0
      %1390 = vmatprep.subr.bf16.mxu0 0
      %1391 = vmatpush1.bf16.xpose.msra.mxu0 0
      %1392 = vmatprep.subr.bf16.mxu0 0
      %1393 = vmatpush1.bf16.xpose.msra.mxu0 0
      %1394 = vmatprep.subr.bf16.mxu0 0
      %1395 = vmatpush1.bf16.xpose.msra.mxu0 0
      %1396 = vmatprep.subr.bf16.mxu0 0
      %1397 = vmatpush1.bf16.xpose.msra.mxu0 0
      %1398 = vmatprep.subr.bf16.mxu0 0
      %1399 = vmatpush1.bf16.xpose.msra.mxu0 0
      %1400 = vmatprep.subr.bf16.mxu0 0
      %1401 = vmatpush1.bf16.xpose.msra.mxu0 0
      %1402 = vmatprep.subr.bf16.mxu0 0
      %1403 = vmatpush1.bf16.xpose.msra.mxu0 0
      %1404 = vmatprep.subr.bf16.mxu0 0
      %1405 = vmatpush1.bf16.xpose.msra.mxu0 0
      %1406 = vmatprep.subr.bf16.mxu0 0
      %1407 = vmatpush1.bf16.xpose.msra.mxu0 0
      %1408 = vmatprep.subr.bf16.mxu0 0
      %1409 = vmatpush1.bf16.xpose.msra.mxu0 0
      %1410 = vmatprep.mubr.bf16.mxu0 0
      %1411 = vmatmul.mubr.bf16.gmra.mrb[0].mxu0 %v1373
      %v1412 = vpop.f32.mrb[0].mxu0
      %v1413 = vadd.f32 %v1315, %v1412
      %v1414 = vpop.f32.mrb[0].mxu0
      %v1415 = vpop.f32.mrb[0].mxu0
      %v1416 = vpop.f32.mrb[0].mxu0
      %1417 = vdwg.mxu0
      %v1419 = vrot.slane %v832, 4
      %v1420 = vrot.slane %v856, 4
      %1421 = vrot.lane.b32.xlu0 %v1420, 96
      %v1422 = vpop.permute.xlu0 %1421
      %v1424 = vsel %vm862, %v1419, 0
      %v1427 = vsel %vm862, %v1422, 0
      %1429 = vmatprep.subr.bf16.mxu0 0
      %1430 = vmatpush1.bf16.xpose.msra.mxu0 %v1427
      %1431 = vmatprep.subr.bf16.mxu0 0
      %1432 = vmatpush1.bf16.xpose.msra.mxu0 0
      %1433 = vmatprep.subr.bf16.mxu0 0
      %1434 = vmatpush1.bf16.xpose.msra.mxu0 0
      %1435 = vmatprep.subr.bf16.mxu0 0
      %1436 = vmatpush1.bf16.xpose.msra.mxu0 0
      %1437 = vmatprep.subr.bf16.mxu0 0
      %1438 = vmatpush1.bf16.xpose.msra.mxu0 0
      %1439 = vmatprep.subr.bf16.mxu0 0
      %1440 = vmatpush1.bf16.xpose.msra.mxu0 0
      %1441 = vmatprep.subr.bf16.mxu0 0
      %1442 = vmatpush1.bf16.xpose.msra.mxu0 0
      %1443 = vmatprep.subr.bf16.mxu0 0
      %1444 = vmatpush1.bf16.xpose.msra.mxu0 0
      %1445 = vmatprep.subr.bf16.mxu0 0
      %1446 = vmatpush1.bf16.xpose.msra.mxu0 0
      %1447 = vmatprep.subr.bf16.mxu0 0
      %1448 = vmatpush1.bf16.xpose.msra.mxu0 0
      %1449 = vmatprep.subr.bf16.mxu0 0
      %1450 = vmatpush1.bf16.xpose.msra.mxu0 0
      %1451 = vmatprep.subr.bf16.mxu0 0
      %1452 = vmatpush1.bf16.xpose.msra.mxu0 0
      %1453 = vmatprep.subr.bf16.mxu0 0
      %1454 = vmatpush1.bf16.xpose.msra.mxu0 0
      %1455 = vmatprep.subr.bf16.mxu0 0
      %1456 = vmatpush1.bf16.xpose.msra.mxu0 0
      %1457 = vmatprep.subr.bf16.mxu0 0
      %1458 = vmatpush1.bf16.xpose.msra.mxu0 0
      %1459 = vmatprep.subr.bf16.mxu0 0
      %1460 = vmatpush1.bf16.xpose.msra.mxu0 0
      %1461 = vmatprep.mubr.bf16.mxu0 0
      %1462 = vmatmul.mubr.bf16.gmra.mrb[0].mxu0 %v1424
      %v1463 = vpop.f32.mrb[0].mxu0
      %v1464 = vadd.f32 %v1315, %v1463
      %v1465 = vpop.f32.mrb[0].mxu0
      %v1466 = vpop.f32.mrb[0].mxu0
      %v1467 = vpop.f32.mrb[0].mxu0
      %1468 = vdwg.mxu0
      %v1470 = vrot.slane %v833, 4
      %v1471 = vrot.slane %v857, 4
      %1472 = vrot.lane.b32.xlu0 %v1471, 96
      %v1473 = vpop.permute.xlu0 %1472
      %v1475 = vsel %vm862, %v1470, 0
      %v1478 = vsel %vm862, %v1473, 0
      %1480 = vmatprep.subr.bf16.mxu0 0
      %1481 = vmatpush1.bf16.xpose.msra.mxu0 %v1478
      %1482 = vmatprep.subr.bf16.mxu0 0
      %1483 = vmatpush1.bf16.xpose.msra.mxu0 0
      %1484 = vmatprep.subr.bf16.mxu0 0
      %1485 = vmatpush1.bf16.xpose.msra.mxu0 0
      %1486 = vmatprep.subr.bf16.mxu0 0
      %1487 = vmatpush1.bf16.xpose.msra.mxu0 0
      %1488 = vmatprep.subr.bf16.mxu0 0
      %1489 = vmatpush1.bf16.xpose.msra.mxu0 0
      %1490 = vmatprep.subr.bf16.mxu0 0
      %1491 = vmatpush1.bf16.xpose.msra.mxu0 0
      %1492 = vmatprep.subr.bf16.mxu0 0
      %1493 = vmatpush1.bf16.xpose.msra.mxu0 0
      %1494 = vmatprep.subr.bf16.mxu0 0
      %1495 = vmatpush1.bf16.xpose.msra.mxu0 0
      %1496 = vmatprep.subr.bf16.mxu0 0
      %1497 = vmatpush1.bf16.xpose.msra.mxu0 0
      %1498 = vmatprep.subr.bf16.mxu0 0
      %1499 = vmatpush1.bf16.xpose.msra.mxu0 0
      %1500 = vmatprep.subr.bf16.mxu0 0
      %1501 = vmatpush1.bf16.xpose.msra.mxu0 0
      %1502 = vmatprep.subr.bf16.mxu0 0
      %1503 = vmatpush1.bf16.xpose.msra.mxu0 0
      %1504 = vmatprep.subr.bf16.mxu0 0
      %1505 = vmatpush1.bf16.xpose.msra.mxu0 0
      %1506 = vmatprep.subr.bf16.mxu0 0
      %1507 = vmatpush1.bf16.xpose.msra.mxu0 0
      %1508 = vmatprep.subr.bf16.mxu0 0
      %1509 = vmatpush1.bf16.xpose.msra.mxu0 0
      %1510 = vmatprep.subr.bf16.mxu0 0
      %1511 = vmatpush1.bf16.xpose.msra.mxu0 0
      %1512 = vmatprep.mubr.bf16.mxu0 0
      %1513 = vmatmul.mubr.bf16.gmra.mrb[0].mxu0 %v1475
      %v1514 = vpop.f32.mrb[0].mxu0
      %v1515 = vadd.f32 %v1315, %v1514
      %v1516 = vpop.f32.mrb[0].mxu0
      %v1517 = vpop.f32.mrb[0].mxu0
      %v1518 = vpop.f32.mrb[0].mxu0
      %1519 = vdwg.mxu0
      %v1520 = vsel %vm862, %v1362, -inf
      %1521 = vmax.xlane.f32.xlu0 %v1520
      %v1522 = vpop.xlane.xlu0 %1521
      %v1523 = vsel %vm862, %v1413, -inf
      %1524 = vmax.xlane.f32.xlu0 %v1523
      %v1525 = vpop.xlane.xlu0 %1524
      %v1526 = vsel %vm862, %v1464, -inf
      %1527 = vmax.xlane.f32.xlu0 %v1526
      %v1528 = vpop.xlane.xlu0 %1527
      %v1529 = vsel %vm862, %v1515, -inf
      %1530 = vmax.xlane.f32.xlu0 %v1529
      %v1531 = vpop.xlane.xlu0 %1530
      %v1532 = vsub.f32 %v1362, %v1522
      %v1533 = vsub.f32 %v1413, %v1525
      %v1534 = vsub.f32 %v1464, %v1528
      %v1535 = vsub.f32 %v1515, %v1531
      %v1536 = vmul.f32 %v1532, 1.442695
      %v1537 = vpow.pop %v1536
      %v1538 = vmul.f32 %v1533, 1.442695
      %v1539 = vpow.pop %v1538
      %v1540 = vmul.f32 %v1534, 1.442695
      %v1541 = vpow.pop %v1540
      %v1542 = vmul.f32 %v1535, 1.442695
      %v1543 = vpow.pop %v1542
      %v1544 = vsel %vm862, %v1537, 0.0
      %1545 = vadd.xlane.f32.xlu0 %v1544
      %v1546 = vpop.xlane.xlu0 %1545
      %v1547 = vsel %vm862, %v1539, 0.0
      %1548 = vadd.xlane.f32.xlu0 %v1547
      %v1549 = vpop.xlane.xlu0 %1548
      %v1550 = vsel %vm862, %v1541, 0.0
      %1551 = vadd.xlane.f32.xlu0 %v1550
      %v1552 = vpop.xlane.xlu0 %1551
      %v1553 = vsel %vm862, %v1543, 0.0
      %1554 = vadd.xlane.f32.xlu0 %v1553
      %v1555 = vpop.xlane.xlu0 %1554
      %v1556 = vrcp.pop %v1546
      %v1557 = vrcp.pop %v1549
      %v1558 = vrcp.pop %v1552
      %v1559 = vrcp.pop %v1555
      %v1560 = vmul.f32 %v1537, %v1556
      %v1561 = vmul.f32 %v1539, %v1557
      %v1562 = vmul.f32 %v1541, %v1558
      %v1563 = vmul.f32 %v1543, %v1559
      %v1564 = vpack.c.bf16 %v1560, %v1560
      %v1565 = vpack.c.bf16 %v1561, %v1561
      %v1566 = vpack.c.bf16 %v1562, %v1562
      %v1567 = vpack.c.bf16 %v1563, %v1563
      %1568 = vrot.lane.b32.xlu0 %v1318, 64
      %v1569 = vpop.permute.xlu0 %1568
      %v1571 = vsel %vm862, %v1564, 0
      %v1574 = vsel %vm1109, %v1569, 0
      %1576 = vmatprep.subr.bf16.mxu0 0
      %1577 = vmatpush1.bf16.msra.mxu0 %v1574
      %1578 = vmatprep.subr.bf16.mxu0 0
      %1579 = vmatpush1.bf16.msra.mxu0 0
      %1580 = vmatprep.subr.bf16.mxu0 0
      %1581 = vmatpush1.bf16.msra.mxu0 0
      %1582 = vmatprep.subr.bf16.mxu0 0
      %1583 = vmatpush1.bf16.msra.mxu0 0
      %1584 = vmatprep.subr.bf16.mxu0 0
      %1585 = vmatpush1.bf16.msra.mxu0 0
      %1586 = vmatprep.subr.bf16.mxu0 0
      %1587 = vmatpush1.bf16.msra.mxu0 0
      %1588 = vmatprep.subr.bf16.mxu0 0
      %1589 = vmatpush1.bf16.msra.mxu0 0
      %1590 = vmatprep.subr.bf16.mxu0 0
      %1591 = vmatpush1.bf16.msra.mxu0 0
      %1592 = vmatprep.subr.bf16.mxu0 0
      %1593 = vmatpush1.bf16.msra.mxu0 0
      %1594 = vmatprep.subr.bf16.mxu0 0
      %1595 = vmatpush1.bf16.msra.mxu0 0
      %1596 = vmatprep.subr.bf16.mxu0 0
      %1597 = vmatpush1.bf16.msra.mxu0 0
      %1598 = vmatprep.subr.bf16.mxu0 0
      %1599 = vmatpush1.bf16.msra.mxu0 0
      %1600 = vmatprep.subr.bf16.mxu0 0
      %1601 = vmatpush1.bf16.msra.mxu0 0
      %1602 = vmatprep.subr.bf16.mxu0 0
      %1603 = vmatpush1.bf16.msra.mxu0 0
      %1604 = vmatprep.subr.bf16.mxu0 0
      %1605 = vmatpush1.bf16.msra.mxu0 0
      %1606 = vmatprep.subr.bf16.mxu0 0
      %1607 = vmatpush1.bf16.msra.mxu0 0
      %1608 = vmatprep.mubr.bf16.mxu0 0
      %1609 = vmatmul.mubr.bf16.gmra.mrb[0].mxu0 %v1571
      %v1610 = vpop.f32.mrb[0].mxu0
      %v1611 = vadd.f32 0.0, %v1610
      %v1612 = vpop.f32.mrb[0].mxu0
      %v1613 = vpop.f32.mrb[0].mxu0
      %v1614 = vpop.f32.mrb[0].mxu0
      %1615 = vdwg.mxu0
      %1616 = vrot.lane.b32.xlu0 %v1369, 64
      %v1617 = vpop.permute.xlu0 %1616
      %v1619 = vsel %vm862, %v1565, 0
      %v1622 = vsel %vm1109, %v1617, 0
      %1624 = vmatprep.subr.bf16.mxu0 0
      %1625 = vmatpush1.bf16.msra.mxu0 %v1622
      %1626 = vmatprep.subr.bf16.mxu0 0
      %1627 = vmatpush1.bf16.msra.mxu0 0
      %1628 = vmatprep.subr.bf16.mxu0 0
      %1629 = vmatpush1.bf16.msra.mxu0 0
      %1630 = vmatprep.subr.bf16.mxu0 0
      %1631 = vmatpush1.bf16.msra.mxu0 0
      %1632 = vmatprep.subr.bf16.mxu0 0
      %1633 = vmatpush1.bf16.msra.mxu0 0
      %1634 = vmatprep.subr.bf16.mxu0 0
      %1635 = vmatpush1.bf16.msra.mxu0 0
      %1636 = vmatprep.subr.bf16.mxu0 0
      %1637 = vmatpush1.bf16.msra.mxu0 0
      %1638 = vmatprep.subr.bf16.mxu0 0
      %1639 = vmatpush1.bf16.msra.mxu0 0
      %1640 = vmatprep.subr.bf16.mxu0 0
      %1641 = vmatpush1.bf16.msra.mxu0 0
      %1642 = vmatprep.subr.bf16.mxu0 0
      %1643 = vmatpush1.bf16.msra.mxu0 0
      %1644 = vmatprep.subr.bf16.mxu0 0
      %1645 = vmatpush1.bf16.msra.mxu0 0
      %1646 = vmatprep.subr.bf16.mxu0 0
      %1647 = vmatpush1.bf16.msra.mxu0 0
      %1648 = vmatprep.subr.bf16.mxu0 0
      %1649 = vmatpush1.bf16.msra.mxu0 0
      %1650 = vmatprep.subr.bf16.mxu0 0
      %1651 = vmatpush1.bf16.msra.mxu0 0
      %1652 = vmatprep.subr.bf16.mxu0 0
      %1653 = vmatpush1.bf16.msra.mxu0 0
      %1654 = vmatprep.subr.bf16.mxu0 0
      %1655 = vmatpush1.bf16.msra.mxu0 0
      %1656 = vmatprep.mubr.bf16.mxu0 0
      %1657 = vmatmul.mubr.bf16.gmra.mrb[0].mxu0 %v1619
      %v1658 = vpop.f32.mrb[0].mxu0
      %v1659 = vadd.f32 0.0, %v1658
      %v1660 = vpop.f32.mrb[0].mxu0
      %v1661 = vpop.f32.mrb[0].mxu0
      %v1662 = vpop.f32.mrb[0].mxu0
      %1663 = vdwg.mxu0
      %1664 = vrot.lane.b32.xlu0 %v1420, 64
      %v1665 = vpop.permute.xlu0 %1664
      %v1667 = vsel %vm862, %v1566, 0
      %v1670 = vsel %vm1109, %v1665, 0
      %1672 = vmatprep.subr.bf16.mxu0 0
      %1673 = vmatpush1.bf16.msra.mxu0 %v1670
      %1674 = vmatprep.subr.bf16.mxu0 0
      %1675 = vmatpush1.bf16.msra.mxu0 0
      %1676 = vmatprep.subr.bf16.mxu0 0
      %1677 = vmatpush1.bf16.msra.mxu0 0
      %1678 = vmatprep.subr.bf16.mxu0 0
      %1679 = vmatpush1.bf16.msra.mxu0 0
      %1680 = vmatprep.subr.bf16.mxu0 0
      %1681 = vmatpush1.bf16.msra.mxu0 0
      %1682 = vmatprep.subr.bf16.mxu0 0
      %1683 = vmatpush1.bf16.msra.mxu0 0
      %1684 = vmatprep.subr.bf16.mxu0 0
      %1685 = vmatpush1.bf16.msra.mxu0 0
      %1686 = vmatprep.subr.bf16.mxu0 0
      %1687 = vmatpush1.bf16.msra.mxu0 0
      %1688 = vmatprep.subr.bf16.mxu0 0
      %1689 = vmatpush1.bf16.msra.mxu0 0
      %1690 = vmatprep.subr.bf16.mxu0 0
      %1691 = vmatpush1.bf16.msra.mxu0 0
      %1692 = vmatprep.subr.bf16.mxu0 0
      %1693 = vmatpush1.bf16.msra.mxu0 0
      %1694 = vmatprep.subr.bf16.mxu0 0
      %1695 = vmatpush1.bf16.msra.mxu0 0
      %1696 = vmatprep.subr.bf16.mxu0 0
      %1697 = vmatpush1.bf16.msra.mxu0 0
      %1698 = vmatprep.subr.bf16.mxu0 0
      %1699 = vmatpush1.bf16.msra.mxu0 0
      %1700 = vmatprep.subr.bf16.mxu0 0
      %1701 = vmatpush1.bf16.msra.mxu0 0
      %1702 = vmatprep.subr.bf16.mxu0 0
      %1703 = vmatpush1.bf16.msra.mxu0 0
      %1704 = vmatprep.mubr.bf16.mxu0 0
      %1705 = vmatmul.mubr.bf16.gmra.mrb[0].mxu0 %v1667
      %v1706 = vpop.f32.mrb[0].mxu0
      %v1707 = vadd.f32 0.0, %v1706
      %v1708 = vpop.f32.mrb[0].mxu0
      %v1709 = vpop.f32.mrb[0].mxu0
      %v1710 = vpop.f32.mrb[0].mxu0
      %1711 = vdwg.mxu0
      %1712 = vrot.lane.b32.xlu0 %v1471, 64
      %v1713 = vpop.permute.xlu0 %1712
      %v1715 = vsel %vm862, %v1567, 0
      %v1718 = vsel %vm1109, %v1713, 0
      %1720 = vmatprep.subr.bf16.mxu0 0
      %1721 = vmatpush1.bf16.msra.mxu0 %v1718
      %1722 = vmatprep.subr.bf16.mxu0 0
      %1723 = vmatpush1.bf16.msra.mxu0 0
      %1724 = vmatprep.subr.bf16.mxu0 0
      %1725 = vmatpush1.bf16.msra.mxu0 0
      %1726 = vmatprep.subr.bf16.mxu0 0
      %1727 = vmatpush1.bf16.msra.mxu0 0
      %1728 = vmatprep.subr.bf16.mxu0 0
      %1729 = vmatpush1.bf16.msra.mxu0 0
      %1730 = vmatprep.subr.bf16.mxu0 0
      %1731 = vmatpush1.bf16.msra.mxu0 0
      %1732 = vmatprep.subr.bf16.mxu0 0
      %1733 = vmatpush1.bf16.msra.mxu0 0
      %1734 = vmatprep.subr.bf16.mxu0 0
      %1735 = vmatpush1.bf16.msra.mxu0 0
      %1736 = vmatprep.subr.bf16.mxu0 0
      %1737 = vmatpush1.bf16.msra.mxu0 0
      %1738 = vmatprep.subr.bf16.mxu0 0
      %1739 = vmatpush1.bf16.msra.mxu0 0
      %1740 = vmatprep.subr.bf16.mxu0 0
      %1741 = vmatpush1.bf16.msra.mxu0 0
      %1742 = vmatprep.subr.bf16.mxu0 0
      %1743 = vmatpush1.bf16.msra.mxu0 0
      %1744 = vmatprep.subr.bf16.mxu0 0
      %1745 = vmatpush1.bf16.msra.mxu0 0
      %1746 = vmatprep.subr.bf16.mxu0 0
      %1747 = vmatpush1.bf16.msra.mxu0 0
      %1748 = vmatprep.subr.bf16.mxu0 0
      %1749 = vmatpush1.bf16.msra.mxu0 0
      %1750 = vmatprep.subr.bf16.mxu0 0
      %1751 = vmatpush1.bf16.msra.mxu0 0
      %1752 = vmatprep.mubr.bf16.mxu0 0
      %1753 = vmatmul.mubr.bf16.gmra.mrb[0].mxu0 %v1715
      %v1754 = vpop.f32.mrb[0].mxu0
      %v1755 = vadd.f32 0.0, %v1754
      %v1756 = vpop.f32.mrb[0].mxu0
      %v1757 = vpop.f32.mrb[0].mxu0
      %v1758 = vpop.f32.mrb[0].mxu0
      %1759 = vdwg.mxu0
      %1761 = vrot.lane.b32.xlu0 %v1659, 8
      %v1762 = vpop.permute.xlu0 %1761
      %1765 = vrot.lane.b32.xlu0 %v1707, 16
      %v1766 = vpop.permute.xlu0 %1765
      %1769 = vrot.lane.b32.xlu0 %v1755, 24
      %v1770 = vpop.permute.xlu0 %1769
      %v1772 = vsel %vm862, %v1611, %v1762
      %v1773 = vsel %vm1310, %v1772, %v1766
      %v1774 = vsel %vm1312, %v1773, %v1770
      %v1775 = vpack.c.bf16 %v1774, %v1313
      %v1776 = vld [vmem:[%s656] sm:$0xf]
      %v1777 = vld [vmem:[%s656 + $0x4] sm:$0xf]
      %v1778 = vld [vmem:[%s656 + $0x8] sm:$0xf]
      %v1779 = vld [vmem:[%s656 + $0xc] sm:$0xf]
      %v1780 = vld [vmem:[%s659] sm:$0x1]
      %v1782 = vlaneseq
      %v1783 = vshrl.u32 %v1782, 7
      %v1784 = vsub.s32 0, %v1783
      %v1785 = vrot.slane %v1780, %v1784
      %v1791 = vunpack.c.l.b16 %v1776
      %v1792 = vunpack.c.l.b16 %v1777
      %v1793 = vunpack.c.l.b16 %v1778
      %v1794 = vunpack.c.l.b16 %v1779
      %v1795 = vpack.c.b16 %v1792, %v1791
      %v1796 = vpack.c.b16 %v1794, %v1793
      %v1800 = vsel %vm763, %v1775, 0
      %1802 = vmatprep.subr.bf16.mxu0 0
      %1803 = vmatpush1.bf16.msra.mxu0 %v1795
      %1804 = vmatprep.subr.bf16.mxu0 0
      %1805 = vmatpush1.bf16.msra.mxu0 %v1796
      %1806 = vmatprep.subr.bf16.mxu0 0
      %1807 = vmatpush1.bf16.msra.mxu0 0
      %1808 = vmatprep.subr.bf16.mxu0 0
      %1809 = vmatpush1.bf16.msra.mxu0 0
      %1810 = vmatprep.subr.bf16.mxu0 0
      %1811 = vmatpush1.bf16.msra.mxu0 0
      %1812 = vmatprep.subr.bf16.mxu0 0
      %1813 = vmatpush1.bf16.msra.mxu0 0
      %1814 = vmatprep.subr.bf16.mxu0 0
      %1815 = vmatpush1.bf16.msra.mxu0 0
      %1816 = vmatprep.subr.bf16.mxu0 0
      %1817 = vmatpush1.bf16.msra.mxu0 0
      %1818 = vmatprep.subr.bf16.mxu0 0
      %1819 = vmatpush1.bf16.msra.mxu0 0
      %1820 = vmatprep.subr.bf16.mxu0 0
      %1821 = vmatpush1.bf16.msra.mxu0 0
      %1822 = vmatprep.subr.bf16.mxu0 0
      %1823 = vmatpush1.bf16.msra.mxu0 0
      %1824 = vmatprep.subr.bf16.mxu0 0
      %1825 = vmatpush1.bf16.msra.mxu0 0
      %1826 = vmatprep.subr.bf16.mxu0 0
      %1827 = vmatpush1.bf16.msra.mxu0 0
      %1828 = vmatprep.subr.bf16.mxu0 0
      %1829 = vmatpush1.bf16.msra.mxu0 0
      %1830 = vmatprep.subr.bf16.mxu0 0
      %1831 = vmatpush1.bf16.msra.mxu0 0
      %1832 = vmatprep.subr.bf16.mxu0 0
      %1833 = vmatpush1.bf16.msra.mxu0 0
      %1834 = vmatprep.mubr.bf16.mxu0 0
      %1835 = vmatmul.mubr.bf16.gmra.mrb[0].mxu0 %v1800
      %v1836 = vpop.f32.mrb[0].mxu0
      %v1837 = vadd.f32 %v1785, %v1836
      %v1838 = vpop.f32.mrb[0].mxu0
      %v1839 = vpop.f32.mrb[0].mxu0
      %v1840 = vadd.f32 %v1785, %v1839
      %v1841 = vpop.f32.mrb[0].mxu0
      %1842 = vdwg.mxu0
      %v1843 = vadd.f32 %v737, %v1837
      %v1844 = vadd.f32 %v738, %v1840
      %v1845 = vld [vmem:[%s662] sm:$0x1]
      %v1846 = vld [vmem:[%s665] sm:$0x1]
      %v1847 = vsel %vm763, %v1843, 0.0
      %1848 = vadd.xlane.f32.xlu0 %v1847
      %v1849 = vpop.xlane.xlu0 %1848
      %v1850 = vsel %vm763, %v1844, 0.0
      %1851 = vadd.xlane.f32.xlu0 %v1850
      %v1852 = vpop.xlane.xlu0 %1851
      %v1853 = vrcp.pop 32.0
      %v1854 = vmul.f32 %v1849, %v1853
      %v1855 = vmul.f32 %v1852, %v1853
      %v1856 = vsub.f32 %v1843, %v1854
      %v1857 = vsub.f32 %v1844, %v1855
      %v1858 = vmul.f32 %v1856, %v1856
      %v1859 = vmul.f32 %v1857, %v1857
      %v1860 = vsel %vm763, %v1858, 0.0
      %1861 = vadd.xlane.f32.xlu0 %v1860
      %v1862 = vpop.xlane.xlu0 %1861
      %v1863 = vsel %vm763, %v1859, 0.0
      %1864 = vadd.xlane.f32.xlu0 %v1863
      %v1865 = vpop.xlane.xlu0 %1864
      %v1866 = vmul.f32 %v1862, %v1853
      %v1867 = vmul.f32 %v1865, %v1853
      %v1868 = vadd.f32 %v1866, 1e-05
      %v1869 = vadd.f32 %v1867, 1e-05
      %v1870 = vrsqrt.pop %v1868
      %v1871 = vrsqrt.pop %v1869
      %v1872 = vmul.f32 %v1856, %v1870
      %v1873 = vmul.f32 %v1857, %v1871
      %v1875 = vlaneseq
      %v1876 = vshrl.u32 %v1875, 7
      %v1877 = vsub.s32 0, %v1876
      %v1878 = vrot.slane %v1845, %v1877
      %v1880 = vmul.f32 %v1872, %v1878
      %v1881 = vmul.f32 %v1873, %v1878
      %v1883 = vlaneseq
      %v1884 = vshrl.u32 %v1883, 7
      %v1885 = vsub.s32 0, %v1884
      %v1886 = vrot.slane %v1846, %v1885
      %v1888 = vadd.f32 %v1880, %v1886
      %v1889 = vadd.f32 %v1881, %v1886
      %v1890 = vpack.c.bf16 %v1889, %v1888
      %v1891 = vld [vmem:[%s670] sm:$0xf]
      %v1892 = vld [vmem:[%s670 + $0x4] sm:$0xf]
      %v1893 = vld [vmem:[%s670 + $0x8] sm:$0xf]
      %v1894 = vld [vmem:[%s670 + $0xc] sm:$0xf]
      %v1895 = vld [vmem:[%s673] sm:$0x1]
      %v1897 = vlaneseq
      %v1898 = vshrl.u32 %v1897, 7
      %v1899 = vsub.s32 0, %v1898
      %v1900 = vrot.slane %v1895, %v1899
      %v1906 = vunpack.c.l.b16 %v1891
      %v1907 = vunpack.c.l.b16 %v1892
      %v1908 = vunpack.c.l.b16 %v1893
      %v1909 = vunpack.c.l.b16 %v1894
      %v1910 = vpack.c.b16 %v1907, %v1906
      %v1911 = vpack.c.b16 %v1909, %v1908
      %v1915 = vsel %vm763, %v1890, 0
      %1917 = vmatprep.subr.bf16.mxu0 0
      %1918 = vmatpush1.bf16.msra.mxu0 %v1910
      %1919 = vmatprep.subr.bf16.mxu0 0
      %1920 = vmatpush1.bf16.msra.mxu0 %v1911
      %1921 = vmatprep.subr.bf16.mxu0 0
      %1922 = vmatpush1.bf16.msra.mxu0 0
      %1923 = vmatprep.subr.bf16.mxu0 0
      %1924 = vmatpush1.bf16.msra.mxu0 0
      %1925 = vmatprep.subr.bf16.mxu0 0
      %1926 = vmatpush1.bf16.msra.mxu0 0
      %1927 = vmatprep.subr.bf16.mxu0 0
      %1928 = vmatpush1.bf16.msra.mxu0 0
      %1929 = vmatprep.subr.bf16.mxu0 0
      %1930 = vmatpush1.bf16.msra.mxu0 0
      %1931 = vmatprep.subr.bf16.mxu0 0
      %1932 = vmatpush1.bf16.msra.mxu0 0
      %1933 = vmatprep.subr.bf16.mxu0 0
      %1934 = vmatpush1.bf16.msra.mxu0 0
      %1935 = vmatprep.subr.bf16.mxu0 0
      %1936 = vmatpush1.bf16.msra.mxu0 0
      %1937 = vmatprep.subr.bf16.mxu0 0
      %1938 = vmatpush1.bf16.msra.mxu0 0
      %1939 = vmatprep.subr.bf16.mxu0 0
      %1940 = vmatpush1.bf16.msra.mxu0 0
      %1941 = vmatprep.subr.bf16.mxu0 0
      %1942 = vmatpush1.bf16.msra.mxu0 0
      %1943 = vmatprep.subr.bf16.mxu0 0
      %1944 = vmatpush1.bf16.msra.mxu0 0
      %1945 = vmatprep.subr.bf16.mxu0 0
      %1946 = vmatpush1.bf16.msra.mxu0 0
      %1947 = vmatprep.subr.bf16.mxu0 0
      %1948 = vmatpush1.bf16.msra.mxu0 0
      %1949 = vmatprep.mubr.bf16.mxu0 0
      %1950 = vmatmul.mubr.bf16.gmra.mrb[0].mxu0 %v1915
      %v1951 = vpop.f32.mrb[0].mxu0
      %v1952 = vadd.f32 %v1900, %v1951
      %v1953 = vpop.f32.mrb[0].mxu0
      %v1954 = vpop.f32.mrb[0].mxu0
      %v1955 = vadd.f32 %v1900, %v1954
      %v1956 = vpop.f32.mrb[0].mxu0
      %1957 = vdwg.mxu0
      %v1958 = vmax.f32 %v1952, 0.0
      %v1959 = vmax.f32 %v1955, 0.0
      %v1960 = vpack.c.bf16 %v1959, %v1958
      %v1961 = vld [vmem:[%s678] sm:$0xf]
      %v1962 = vld [vmem:[%s678 + $0x4] sm:$0xf]
      %v1963 = vld [vmem:[%s678 + $0x8] sm:$0xf]
      %v1964 = vld [vmem:[%s678 + $0xc] sm:$0xf]
      %v1965 = vld [vmem:[%s678 + $0x10] sm:$0xf]
      %v1966 = vld [vmem:[%s678 + $0x14] sm:$0xf]
      %v1967 = vld [vmem:[%s678 + $0x18] sm:$0xf]
      %v1968 = vld [vmem:[%s678 + $0x1c] sm:$0xf]
      %v1969 = vld [vmem:[%s681] sm:$0x1]
      %v1971 = vlaneseq
      %v1972 = vshrl.u32 %v1971, 7
      %v1973 = vsub.s32 0, %v1972
      %v1974 = vrot.slane %v1969, %v1973
      %v1984 = vunpack.c.l.b16 %v1961
      %v1985 = vunpack.c.l.b16 %v1962
      %v1986 = vunpack.c.l.b16 %v1963
      %v1987 = vunpack.c.l.b16 %v1964
      %v1988 = vunpack.c.l.b16 %v1965
      %v1989 = vunpack.c.l.b16 %v1966
      %v1990 = vunpack.c.l.b16 %v1967
      %v1991 = vunpack.c.l.b16 %v1968
      %v1992 = vpack.c.b16 %v1985, %v1984
      %v1993 = vpack.c.b16 %v1987, %v1986
      %v1994 = vpack.c.b16 %v1989, %v1988
      %v1995 = vpack.c.b16 %v1991, %v1990
      %vm2000 = vcmask 523264
      %v2002 = vsel %vm2000, %v1960, 0
      %2004 = vmatprep.subr.bf16.mxu0 0
      %2005 = vmatpush1.bf16.msra.mxu0 %v1992
      %2006 = vmatprep.subr.bf16.mxu0 0
      %2007 = vmatpush1.bf16.msra.mxu0 %v1993
      %2008 = vmatprep.subr.bf16.mxu0 0
      %2009 = vmatpush1.bf16.msra.mxu0 %v1994
      %2010 = vmatprep.subr.bf16.mxu0 0
      %2011 = vmatpush1.bf16.msra.mxu0 %v1995
      %2012 = vmatprep.subr.bf16.mxu0 0
      %2013 = vmatpush1.bf16.msra.mxu0 0
      %2014 = vmatprep.subr.bf16.mxu0 0
      %2015 = vmatpush1.bf16.msra.mxu0 0
      %2016 = vmatprep.subr.bf16.mxu0 0
      %2017 = vmatpush1.bf16.msra.mxu0 0
      %2018 = vmatprep.subr.bf16.mxu0 0
      %2019 = vmatpush1.bf16.msra.mxu0 0
      %2020 = vmatprep.subr.bf16.mxu0 0
      %2021 = vmatpush1.bf16.msra.mxu0 0
      %2022 = vmatprep.subr.bf16.mxu0 0
      %2023 = vmatpush1.bf16.msra.mxu0 0
      %2024 = vmatprep.subr.bf16.mxu0 0
      %2025 = vmatpush1.bf16.msra.mxu0 0
      %2026 = vmatprep.subr.bf16.mxu0 0
      %2027 = vmatpush1.bf16.msra.mxu0 0
      %2028 = vmatprep.subr.bf16.mxu0 0
      %2029 = vmatpush1.bf16.msra.mxu0 0
      %2030 = vmatprep.subr.bf16.mxu0 0
      %2031 = vmatpush1.bf16.msra.mxu0 0
      %2032 = vmatprep.subr.bf16.mxu0 0
      %2033 = vmatpush1.bf16.msra.mxu0 0
      %2034 = vmatprep.subr.bf16.mxu0 0
      %2035 = vmatpush1.bf16.msra.mxu0 0
      %2036 = vmatprep.mubr.bf16.mxu0 0
      %2037 = vmatmul.mubr.bf16.gmra.mrb[0].mxu0 %v2002
      %v2038 = vpop.f32.mrb[0].mxu0
      %v2039 = vadd.f32 %v1974, %v2038
      %v2040 = vpop.f32.mrb[0].mxu0
      %v2041 = vpop.f32.mrb[0].mxu0
      %v2042 = vadd.f32 %v1974, %v2041
      %v2043 = vpop.f32.mrb[0].mxu0
      %2044 = vdwg.mxu0
      %v2045 = vadd.f32 %v1888, %v2039
      %v2046 = vadd.f32 %v1889, %v2042
      %v2047 = vld [vmem:[%s684] sm:$0x1]
      %v2048 = vld [vmem:[%s687] sm:$0x1]
      %v2049 = vsel %vm763, %v2045, 0.0
      %2050 = vadd.xlane.f32.xlu0 %v2049
      %v2051 = vpop.xlane.xlu0 %2050
      %v2052 = vsel %vm763, %v2046, 0.0
      %2053 = vadd.xlane.f32.xlu0 %v2052
      %v2054 = vpop.xlane.xlu0 %2053
      %v2055 = vmul.f32 %v2051, %v1853
      %v2056 = vmul.f32 %v2054, %v1853
      %v2057 = vsub.f32 %v2045, %v2055
      %v2058 = vsub.f32 %v2046, %v2056
      %v2059 = vmul.f32 %v2057, %v2057
      %v2060 = vmul.f32 %v2058, %v2058
      %v2061 = vsel %vm763, %v2059, 0.0
      %2062 = vadd.xlane.f32.xlu0 %v2061
      %v2063 = vpop.xlane.xlu0 %2062
      %v2064 = vsel %vm763, %v2060, 0.0
      %2065 = vadd.xlane.f32.xlu0 %v2064
      %v2066 = vpop.xlane.xlu0 %2065
      %v2067 = vmul.f32 %v2063, %v1853
      %v2068 = vmul.f32 %v2066, %v1853
      %v2069 = vadd.f32 %v2067, 1e-05
      %v2070 = vadd.f32 %v2068, 1e-05
      %v2071 = vrsqrt.pop %v2069
      %v2072 = vrsqrt.pop %v2070
      %v2073 = vmul.f32 %v2057, %v2071
      %v2074 = vmul.f32 %v2058, %v2072
      %v2076 = vlaneseq
      %v2077 = vshrl.u32 %v2076, 7
      %v2078 = vsub.s32 0, %v2077
      %v2079 = vrot.slane %v2047, %v2078
      %v2081 = vmul.f32 %v2073, %v2079
      %v2082 = vmul.f32 %v2074, %v2079
      %v2084 = vlaneseq
      %v2085 = vshrl.u32 %v2084, 7
      %v2086 = vsub.s32 0, %v2085
      %v2087 = vrot.slane %v2048, %v2086
      %v2089 = vadd.f32 %v2081, %v2087
      %v2090 = vadd.f32 %v2082, %v2087
      %2091 = vst.msk [vmem:[#allocation2] sm:$0xff] %vm763, %v2089
      %2092 = vst.msk [vmem:[#allocation2 + $0x8] sm:$0xff] %vm763, %v2090
      %p2093 = scmp.eq.s32.totalorder %s30, 1
      // Predicated region
      $region81: #{lm_forward.2} parent=75 // pred_check
        %p2094 = pneg %p2093
      $region82: #{lm_forward.2} parent=75 // pred_check_branch
        %2096 = sbr.rel (%p2094) target = $region84
      $region83: #{lm_forward.2} parent=75 // pred_region
        %v2097 = vpack.c.bf16 %v2089, %v2089
        %vm2098 = vcmask 257024
        %2099 = vst.msk [vmem:[%s692] sm:$0xf] %vm2098, %v2097
        %v2100 = vpack.c.bf16 %v2090, %v2090
        %s2101 = scalar_lea.vmem %s692, 4
        %2102 = vst.msk [vmem:[%s2101] sm:$0xf] %vm2098, %v2100
      $region84: #{lm_forward.2} parent=75 // pred_fallthru
        _
      %s2103 = smul.u32 2, %s29
      %p2104 = scmp.lt.s32.totalorder %s2103, 3
      %s2105 = scalar_select %p2104, %s2103, 3
      %s2106 = smul.addr %s2105, 4
      %s2107 = scalar_lea.vmem %s14, %s2106
      // Predicated region
      $region85: #{lm_forward.2} parent=75 // pred_check
        %p2108 = pneg %p419
      $region86: #{lm_forward.2} parent=75 // pred_check_branch
        %2110 = sbr.rel (%p2108) target = $region88
      $region87: #{lm_forward.2} parent=75 // pred_region
        %s2111 = smul.u32 2, %s29
      $region88: #{lm_forward.2} parent=75 // pred_fallthru
        _
    $region76: #{lm_forward.2} parent=5 // pred_fallthru
      _
    %p2112 = scmp.le.s32.totalorder 2, %s20
    // Predicated region
    $region89: #{lm_forward.2} parent=5 // pred_check
      %p2113 = pneg %p2112
    $region90: #{lm_forward.2} parent=5 // pred_check_branch
      %2115 = sbr.rel (%p2113) target = $region92
    $region91: #{lm_forward.2} parent=5 // pred_region
      %s2116 = ssub.s32 %s20, 2
      // Predicated region
      $region93: #{lm_forward.2} parent=91 // pred_check
        %p2117 = pneg %p425
      $region94: #{lm_forward.2} parent=91 // pred_check_branch
        %2119 = sbr.rel (%p2117) target = $region96
      $region95: #{lm_forward.2} parent=91 // pred_region
        %s2120 = smul.u32 2, %s31
        %p2121 = scmp.lt.s32.totalorder %s2120, 3
        %s2122 = scalar_select %p2121, %s2120, 3
        %s2123 = smul.addr %s2122, 4
        %s2124 = scalar_lea.vmem %s14, %s2123
      $region96: #{lm_forward.2} parent=91 // pred_fallthru
        _
    $region92: #{lm_forward.2} parent=5 // pred_fallthru
      _
  $region6: #{lm_forward.2} parent=0 // loop_footer
    %s24 = sadd.s32 1, %s20
  $region7: #{lm_forward.2} parent=0 // loop_footer_branch
    %19 = sbr.rel target = $region3
  $region8: #{lm_forward.2} parent=0 // loop_exit
    _

</llo_original>
